<compile_context>
chip_gen: v7x
topology: tpu7x:2x2x1
jax: 0.10.0
libtpu: 0.0.40
codegen_flags: <defaults>
</compile_context>

<pallas_src>
import jax
import jax.numpy as jnp
from jax import lax
from jax.experimental import pallas as pl
from jax.experimental.pallas import tpu as pltpu


def _round_up(n, m):
    return ((n + m - 1) // m) * m


def _vmem_cap_bytes():
    """~75% of physical per-core VMEM (v5e/v6e: 128 MiB, v7x: 64 MiB)."""
    cap = 64 * 1024 * 1024
    try:
        info = pltpu.get_tpu_info()
        cap = int(getattr(info, "vmem_capacity_bytes", cap))
    except Exception:
        pass
    return (3 * cap) // 4


def location_guide_module(x, guiding_map0, params, *,
                          compute_dtype=jnp.float32,
                          max_tq=2048, max_tkv=512):
    """x: (B, C, H, W), guiding_map0: (B, 1, H, W) -> (B, C, H, W).

    compute_dtype=jnp.bfloat16 is the recommended setting on v6e/v7x: kv
    stream + weights + MXU operands in bf16, f32 accumulation/softmax/residual.
    """
    B, C, H, W = x.shape
    N = H * W
    cq = params["wq"].shape[0]                      # C // 8
    cqp = max(8, _round_up(cq, 8))                  # q/k rows, sublane padded
    c_ext = _round_up(C + 1, 8)                     # v rows + 1 ones-row, padded
    kv_rows = cqp + c_ext                           # fused [k ; v ; ones ; pad]
    itemsize_c = jnp.dtype(compute_dtype).itemsize
    f32 = jnp.float32
    max_tkv = max(128, max_tkv)

    # ---- parameter prep (zero-padding keeps results bit-identical) ----------
    wq = jnp.zeros((cqp, C), compute_dtype).at[:cq].set(
        params["wq"].astype(compute_dtype))
    bq = jnp.zeros((cqp, 1), f32).at[:cq, 0].set(params["bq"].astype(f32))

    # Fused k/v projection weight.  Row (cqp + C) has zero weight and bias 1:
    # after the dot it is exactly 1, so the PV matmul's row C of the result is
    # sum_j p[j, i] — the softmax denominator — fused into one MXU op.
    wkv = jnp.zeros((kv_rows, C), compute_dtype)
    wkv = wkv.at[:cq].set(params["wk"].astype(compute_dtype))
    wkv = wkv.at[cqp:cqp + C].set(params["wv"].astype(compute_dtype))
    bkv = jnp.zeros((kv_rows, 1), f32)
    bkv = bkv.at[:cq, 0].set(params["bk"].astype(f32))
    bkv = bkv.at[cqp:cqp + C, 0].set(params["bv"].astype(f32))
    bkv = bkv.at[cqp + C, 0].set(1.0)               # the "ones" row
    # rows that receive the (1 + sigmoid(g)) scale: k and v rows, NOT the ones
    # row (it must stay exactly 1) nor the zero pad rows.
    vmask = jnp.zeros((kv_rows, 1), f32).at[:cqp + C, 0].set(1.0)
    gamma = params["gamma"].astype(f32).reshape(1, 1)

    # ---- tile selection under the VMEM cap ----------------------------------
    vmem_cap = _vmem_cap_bytes()

    def footprint(tq, tkv):
        b = 2 * (C * tq + tq) * 4                              # xq + gq (f32)
        b += 2 * (C * tkv * itemsize_c + tkv * 4)              # xkv + gkv
        b += 2 * (cqp * C * itemsize_c + cqp * 4)              # wq + bq
        b += 2 * (kv_rows * C * itemsize_c + 2 * kv_rows * 4)  # wkv + bkv + mask
        b += 2 * C * tq * 4                                    # out tile
        b += cqp * tq * itemsize_c + tq * 4 + c_ext * tq * 4   # scratch
        b += (2 * 4 + itemsize_c) * tkv * tq                   # energy/p temps
        b += 3 * kv_rows * tkv * 4                             # kv projection temps
        return b

    tq_cap = max(128, min(max_tq, _round_up(N, 128)))
    tq_cands = [t for t in (2048, 1024, 512, 256, 128) if t <= tq_cap] or [128]
    configs = []
    for t in tq_cands:
        tk = max(c for c in (512, 256, 128) if c <= min(max_tkv, t) and t % c == 0)
        configs.append((t, tk))
    fitting = [cfg for cfg in configs if footprint(*cfg) <= vmem_cap] or [configs[-1]]
    if B == 1:  # keep both v7x TensorCores busy: prefer nq >= 2 when possible
        multi_q = [cfg for cfg in fitting if (N + cfg[0] - 1) // cfg[0] >= 2]
        if multi_q:
            fitting = multi_q
    tq, tkv = fitting[0]
    vmem_limit = int(min(vmem_cap,
                         max(int(1.5 * footprint(tq, tkv)), 32 * 1024 * 1024)))

    # ---- input prep: channels-first, pad N to a multiple of TQ --------------
    n_pad = _round_up(N, tq)
    x_cn = x.astype(f32).reshape(B, C, N)
    g_cn = guiding_map0.astype(f32).reshape(B, 1, N)
    if n_pad != N:
        x_cn = jnp.pad(x_cn, ((0, 0), (0, 0), (0, n_pad - N)))
        g_cn = jnp.pad(g_cn, ((0, 0), (0, 0), (0, n_pad - N)))
    # kv stream is the one re-read nq times per batch -> narrow dtype.
    x_kv = x_cn.astype(compute_dtype)
    nq = n_pad // tq
    nkv = n_pad // tkv
    need_kv_mask = n_pad != N

    # TODO(synk): on v7x (compute-bound) a separate one-pass K/V pre-projection
    # pallas_call could remove the nq-fold recomputation of the kv projection;
    # on v5e/v6e (HBM-bound) recomputing it here is the right trade.

    def kernel(xq_ref, gq_ref, xkv_ref, gkv_ref,
               wq_ref, bq_ref, wkv_ref, bkv_ref, vmask_ref, gamma_ref,
               o_ref, q_scr, m_scr, acc_scr):
        ki = pl.program_id(2)
        nk = pl.num_programs(2)

        # ---- init: project q once per query tile, reset softmax stats ------
        @pl.when(ki == 0)
        def _init():
            xq = xq_ref[0]                                     # (C, TQ) f32
            scale_q = 1.0 + jax.nn.sigmoid(gq_ref[0])          # (1, TQ)
            q = (jnp.dot(wq_ref[...], xq.astype(compute_dtype),
                         preferred_element_type=jnp.float32)
                 + bq_ref[...]) * scale_q                      # (Cqp, TQ) f32
            q_scr[...] = q.astype(compute_dtype)               # cast once
            m_scr[...] = jnp.full_like(m_scr, -jnp.inf)
            acc_scr[...] = jnp.zeros_like(acc_scr)

        # ---- fused k | v | ones projection for this kv tile ----------------
        sig_kv = jax.nn.sigmoid(gkv_ref[0])                    # (1, TKV) f32
        scale_kv = 1.0 + vmask_ref[...] * sig_kv               # (KVR, TKV)
        kv = (jnp.dot(wkv_ref[...], xkv_ref[0],
                      preferred_element_type=jnp.float32)
              + bkv_ref[...]) * scale_kv                       # (KVR, TKV) f32
        k = kv[:cqp]                                           # (Cqp, TKV)
        v_ext = kv[cqp:]                                       # (C_ext, TKV); row C == 1

        # energy_T[j, i] = sum_c k[c, j] * q[c, i]   (no materialized k.T)
        energy = lax.dot_general(
            k.astype(compute_dtype), q_scr[...],
            dimension_numbers=(((0,), (0,)), ((), ())),
            preferred_element_type=jnp.float32)                # (TKV, TQ)

        if need_kv_mask:  # static: only when N was padded
            kv_pos = ki * tkv + lax.broadcasted_iota(jnp.int32, (tkv, 1), 0)
            energy = jnp.where(kv_pos < N, energy, -jnp.inf)

        # ---- online softmax update ------------------------------------------
        m_prev = m_scr[...]                                    # (1, TQ)
        m_new = jnp.maximum(m_prev, jnp.max(energy, axis=0, keepdims=True))
        alpha = jnp.exp(m_prev - m_new)                        # (1, TQ)
        p = jnp.exp(energy - m_new)                            # (TKV, TQ) f32

        # One MXU op: rows [:C] = PV update, row C = sum(p) (softmax denom),
        # thanks to the ones-row baked into the stacked weights.
        acc_scr[...] = alpha * acc_scr[...] + jnp.dot(
            v_ext.astype(compute_dtype), p.astype(compute_dtype),
            preferred_element_type=jnp.float32)                # (C_ext, TQ)
        m_scr[...] = m_new

        # ---- finalize: normalize, gamma, residual ---------------------------
        @pl.when(ki == nk - 1)
        def _finalize():
            acc = acc_scr[...]                                 # (C_ext, TQ) f32
            inv_l = pl.reciprocal(acc[C:C + 1, :], approx=False)
            gamma_s = gamma_ref[0, 0]
            o_ref[0] = gamma_s * (acc[:C, :] * inv_l) + xq_ref[0]

    out_cn = pl.pallas_call(
        kernel,
        out_shape=jax.ShapeDtypeStruct((B, C, n_pad), jnp.float32),
        grid_spec=pltpu.PrefetchScalarGridSpec(
            num_scalar_prefetch=0,
            grid=(B, nq, nkv),                                 # kv axis innermost
            in_specs=[
                pl.BlockSpec((1, C, tq), lambda b, qi, ki: (b, 0, qi)),   # x (q/residual, f32)
                pl.BlockSpec((1, 1, tq), lambda b, qi, ki: (b, 0, qi)),   # g (q tile)
                pl.BlockSpec((1, C, tkv), lambda b, qi, ki: (b, 0, ki)),  # x (kv stream)
                pl.BlockSpec((1, 1, tkv), lambda b, qi, ki: (b, 0, ki)),  # g (kv tile)
                pl.BlockSpec((cqp, C), lambda b, qi, ki: (0, 0)),         # Wq
                pl.BlockSpec((cqp, 1), lambda b, qi, ki: (0, 0)),         # bq
                pl.BlockSpec((kv_rows, C), lambda b, qi, ki: (0, 0)),     # [Wk;Wv;0] fused
                pl.BlockSpec((kv_rows, 1), lambda b, qi, ki: (0, 0)),     # [bk;bv;1]
                pl.BlockSpec((kv_rows, 1), lambda b, qi, ki: (0, 0)),     # scale row-mask
                pl.BlockSpec(memory_space=pltpu.MemorySpace.SMEM),        # gamma
            ],
            out_specs=pl.BlockSpec((1, C, tq), lambda b, qi, ki: (b, 0, qi)),
            scratch_shapes=[
                pltpu.VMEM((cqp, tq), compute_dtype),   # q (compute dtype, cast once)
                pltpu.VMEM((1, tq), jnp.float32),       # running max
                pltpu.VMEM((c_ext, tq), jnp.float32),   # fused [acc ; softmax denom]
            ],
        ),
        compiler_params=pltpu.CompilerParams(
            dimension_semantics=("parallel", "parallel", "arbitrary"),
            vmem_limit_bytes=vmem_limit,
        ),
    )(x_cn, g_cn, x_kv, g_cn, wq, bq, wkv, bkv, vmask, gamma)

    out = out_cn[:, :, :N] if n_pad != N else out_cn
    return out.reshape(B, C, H, W)


def reference(x, guiding_map0, params):
    """Pure-JAX re-implementation of the PyTorch forward (for verification)."""
    B, C, H, W = x.shape
    N = H * W
    g = jax.nn.sigmoid(guiding_map0)

    def conv1x1(inp, w, b):                 # w: (Cout, Cin)
        return jnp.einsum("bchw,dc->bdhw", inp, w) + b.reshape(1, -1, 1, 1)

    q = conv1x1(x, params["wq"], params["bq"]) * (1.0 + g)
    k = conv1x1(x, params["wk"], params["bk"]) * (1.0 + g)
    v = conv1x1(x, params["wv"], params["bv"]) * (1.0 + g)

    pq = jnp.transpose(q.reshape(B, -1, N), (0, 2, 1))      # (B, N, Cq)
    pk = k.reshape(B, -1, N)                                # (B, Cq, N)
    energy = jnp.einsum("bnc,bcm->bnm", pq, pk)             # (B, N, N)
    attn = jax.nn.softmax(energy, axis=-1)
    pv = v.reshape(B, C, N)                                 # (B, C, N)
    out = jnp.einsum("bcn,bmn->bcm", pv, attn)              # (B, C, N)
    return params["gamma"].reshape(()) * out.reshape(B, C, H, W) + x


if __name__ == "__main__":
    key = jax.random.PRNGKey(0)
    B, C, H, W = 2, 32, 16, 16           # in_dim=32 -> Cq = 4, N = 256
    Cq = C // 8
    ks = jax.random.split(key, 10)

    x = jax.random.normal(ks[0], (B, C, H, W), jnp.float32)
    guiding_map0 = jax.random.normal(ks[1], (B, 1, H, W), jnp.float32)

    # Parameters in PyTorch 1x1-conv layout: weight (Cout, Cin), bias (Cout,).
    params = {
        "wq": 0.1 * jax.random.normal(ks[2], (Cq, C), jnp.float32),
        "bq": 0.1 * jax.random.normal(ks[3], (Cq,), jnp.float32),
        "wk": 0.1 * jax.random.normal(ks[4], (Cq, C), jnp.float32),
        "bk": 0.1 * jax.random.normal(ks[5], (Cq,), jnp.float32),
        "wv": 0.1 * jax.random.normal(ks[6], (C, C), jnp.float32),
        "bv": 0.1 * jax.random.normal(ks[7], (C,), jnp.float32),
        # PyTorch inits gamma to 0 (=> out == x); use 0.5 so the attention path
        # is actually exercised.  Forward semantics unchanged.
        "gamma": jnp.full((1,), 0.5, jnp.float32),
    }

    ref = reference(x, guiding_map0, params)

    # 1) f32, max_tq=128 forces a (2, 2, 2) grid so the flash-style online
    #    softmax accumulation across kv tiles is exercised even at N=256.
    out = jax.block_until_ready(
        location_guide_module(x, guiding_map0, params, max_tq=128))
    assert out.shape == (B, C, H, W)
    err = float(jnp.max(jnp.abs(out - ref)))
    assert jnp.allclose(out, ref, atol=1e-3, rtol=1e-3), f"f32 mismatch: {err}"

    # 2) bf16 compute path (recommended on v6e/v7x): bf16 kv stream / weights /
    #    MXU operands, f32 accumulation + residual.  Looser tolerance.
    out_bf16 = jax.block_until_ready(
        location_guide_module(x, guiding_map0, params,
                              compute_dtype=jnp.bfloat16))
    err_b = float(jnp.max(jnp.abs(out_bf16 - ref)))
    assert jnp.allclose(out_bf16, ref, atol=6e-2, rtol=6e-2), \
        f"bf16 mismatch: {err_b}"

    # 3) N = 12*12 = 144 (not a multiple of 128): exercises the padding +
    #    -inf kv-masking path that replaced the full-extent tile fallback.
    x2 = jax.random.normal(ks[8], (B, C, 12, 12), jnp.float32)
    g2 = jax.random.normal(ks[9], (B, 1, 12, 12), jnp.float32)
    out2 = jax.block_until_ready(
        location_guide_module(x2, g2, params, max_tq=128))
    ref2 = reference(x2, g2, params)
    err2 = float(jnp.max(jnp.abs(out2 - ref2)))
    assert jnp.allclose(out2, ref2, atol=1e-3, rtol=1e-3), \
        f"padded-N mismatch: {err2}"

    print("KERNEL_OK")
</pallas_src>

<mosaic_0001>
module attributes {stable_mosaic.version = 11 : i64} {
  func.func @kernel(%arg0: i32, %arg1: i32, %arg2: i32, %arg3: memref<1x32x128xf32, #tpu.memory_space<vmem>>, %arg4: memref<1x1x128xf32, #tpu.memory_space<vmem>>, %arg5: memref<1x32x128xf32, #tpu.memory_space<vmem>>, %arg6: memref<1x1x128xf32, #tpu.memory_space<vmem>>, %arg7: memref<8x32xf32, #tpu.memory_space<vmem>>, %arg8: memref<8x1xf32, #tpu.memory_space<vmem>>, %arg9: memref<48x32xf32, #tpu.memory_space<vmem>>, %arg10: memref<48x1xf32, #tpu.memory_space<vmem>>, %arg11: memref<48x1xf32, #tpu.memory_space<vmem>>, %arg12: memref<1x1xf32, #tpu.memory_space<smem>>, %arg13: memref<1x32x128xf32, #tpu.memory_space<vmem>>, %arg14: memref<8x128xf32, #tpu.memory_space<vmem>>, %arg15: memref<1x128xf32, #tpu.memory_space<vmem>>, %arg16: memref<40x128xf32, #tpu.memory_space<vmem>>) attributes {dimension_semantics = [#tpu.dimension_semantics<parallel>, #tpu.dimension_semantics<parallel>, #tpu.dimension_semantics<arbitrary>], iteration_bounds = array<i64: 2, 2, 2>, scalar_prefetch = 0 : i64, scratch_operands = 3 : i64, tpu.core_type = #tpu.core_type<tc>, window_params = [{transform_indices = @transform_0, window_bounds = array<i64: 1, 32, 128>}, {transform_indices = @transform_1, window_bounds = array<i64: 1, 1, 128>}, {transform_indices = @transform_2, window_bounds = array<i64: 1, 32, 128>}, {transform_indices = @transform_3, window_bounds = array<i64: 1, 1, 128>}, {pipeline_mode = #tpu.pipeline_mode<synchronous>, transform_indices = @transform_4, window_bounds = array<i64: 8, 32>}, {pipeline_mode = #tpu.pipeline_mode<synchronous>, transform_indices = @transform_5, window_bounds = array<i64: 8, 1>}, {pipeline_mode = #tpu.pipeline_mode<synchronous>, transform_indices = @transform_6, window_bounds = array<i64: 48, 32>}, {pipeline_mode = #tpu.pipeline_mode<synchronous>, transform_indices = @transform_7, window_bounds = array<i64: 48, 1>}, {pipeline_mode = #tpu.pipeline_mode<synchronous>, transform_indices = @transform_8, window_bounds = array<i64: 48, 1>}, {transform_indices = @transform_9, window_bounds = array<i64: 1, 1>}, {transform_indices = @transform_10, window_bounds = array<i64: 1, 32, 128>}]} {
    %c0_i32 = arith.constant 0 : i32
    %0 = arith.cmpi eq, %arg2, %c0_i32 : i32
    %1 = arith.extui %0 : i1 to i32
    %c0_i32_0 = arith.constant 0 : i32
    %2 = arith.cmpi ne, %1, %c0_i32_0 : i32
    scf.if %2 {
      %c0_28 = arith.constant 0 : index
      %c0_29 = arith.constant 0 : index
      %c0_30 = arith.constant 0 : index
      %47 = vector.load %arg3[%c0_28, %c0_29, %c0_30] : memref<1x32x128xf32, #tpu.memory_space<vmem>>, vector<1x32x128xf32>
      %48 = vector.shape_cast %47 : vector<1x32x128xf32> to vector<32x128xf32>
      %c0_31 = arith.constant 0 : index
      %c0_32 = arith.constant 0 : index
      %c0_33 = arith.constant 0 : index
      %49 = vector.load %arg4[%c0_31, %c0_32, %c0_33] : memref<1x1x128xf32, #tpu.memory_space<vmem>>, vector<1x1x128xf32>
      %50 = vector.shape_cast %49 : vector<1x1x128xf32> to vector<1x128xf32>
      %51 = arith.negf %50 : vector<1x128xf32>
      %52 = math.exp %51 : vector<1x128xf32>
      %cst_34 = arith.constant 1.000000e+00 : f32
      %53 = vector.broadcast %cst_34 : f32 to vector<1x128xf32>
      %54 = arith.addf %53, %52 : vector<1x128xf32>
      %55 = arith.divf %53, %54 : vector<1x128xf32>
      %cst_35 = arith.constant 1.000000e+00 : f32
      %56 = vector.broadcast %cst_35 : f32 to vector<1x128xf32>
      %57 = arith.addf %56, %55 : vector<1x128xf32>
      %c0_36 = arith.constant 0 : index
      %c0_37 = arith.constant 0 : index
      %58 = vector.load %arg7[%c0_36, %c0_37] : memref<8x32xf32, #tpu.memory_space<vmem>>, vector<8x32xf32>
      %cst_38 = arith.constant dense<0.000000e+00> : vector<8x128xf32>
      %59 = tpu.matmul %58, %48, %cst_38 {dimension_numbers = #tpu.dot_dimension_numbers<[1], [0], [0], [1], [0, 0, 1, 1], [], []>} : vector<8x32xf32>, vector<32x128xf32>, vector<8x128xf32> -> vector<8x128xf32>
      %c0_39 = arith.constant 0 : index
      %c0_40 = arith.constant 0 : index
      %60 = vector.load %arg8[%c0_39, %c0_40] : memref<8x1xf32, #tpu.memory_space<vmem>>, vector<8x1xf32>
      %61 = vector.broadcast %60 : vector<8x1xf32> to vector<8x128xf32>
      %62 = arith.addf %59, %61 : vector<8x128xf32>
      %63 = vector.broadcast %57 : vector<1x128xf32> to vector<8x128xf32>
      %64 = arith.mulf %62, %63 : vector<8x128xf32>
      %c0_41 = arith.constant 0 : index
      %c0_42 = arith.constant 0 : index
      %65 = vector.load %arg14[%c0_41, %c0_42] : memref<8x128xf32, #tpu.memory_space<vmem>>, vector<8x128xf32>
      tpu.vector_store %arg14[%c0_41, %c0_42], %64 {strides = array<i32>} : memref<8x128xf32, #tpu.memory_space<vmem>>, vector<8x128xf32>,
      %cst_43 = arith.constant 0xFF800000 : f32
      %66 = vector.broadcast %cst_43 : f32 to vector<1x128xf32>
      %c0_44 = arith.constant 0 : index
      %c0_45 = arith.constant 0 : index
      %67 = vector.load %arg15[%c0_44, %c0_45] : memref<1x128xf32, #tpu.memory_space<vmem>>, vector<1x128xf32>
      tpu.vector_store %arg15[%c0_44, %c0_45], %66 {strides = array<i32>} : memref<1x128xf32, #tpu.memory_space<vmem>>, vector<1x128xf32>,
      %cst_46 = arith.constant 0.000000e+00 : f32
      %68 = vector.broadcast %cst_46 : f32 to vector<40x128xf32>
      %c0_47 = arith.constant 0 : index
      %c0_48 = arith.constant 0 : index
      %69 = vector.load %arg16[%c0_47, %c0_48] : memref<40x128xf32, #tpu.memory_space<vmem>>, vector<40x128xf32>
      tpu.vector_store %arg16[%c0_47, %c0_48], %68 {strides = array<i32>} : memref<40x128xf32, #tpu.memory_space<vmem>>, vector<40x128xf32>,
    } else {
    }
    %c0 = arith.constant 0 : index
    %c0_1 = arith.constant 0 : index
    %c0_2 = arith.constant 0 : index
    %3 = vector.load %arg6[%c0, %c0_1, %c0_2] : memref<1x1x128xf32, #tpu.memory_space<vmem>>, vector<1x1x128xf32>
    %4 = vector.shape_cast %3 : vector<1x1x128xf32> to vector<1x128xf32>
    %5 = arith.negf %4 : vector<1x128xf32>
    %6 = math.exp %5 : vector<1x128xf32>
    %cst = arith.constant 1.000000e+00 : f32
    %7 = vector.broadcast %cst : f32 to vector<1x128xf32>
    %8 = arith.addf %7, %6 : vector<1x128xf32>
    %9 = arith.divf %7, %8 : vector<1x128xf32>
    %c0_3 = arith.constant 0 : index
    %c0_4 = arith.constant 0 : index
    %10 = vector.load %arg11[%c0_3, %c0_4] : memref<48x1xf32, #tpu.memory_space<vmem>>, vector<48x1xf32>
    %11 = vector.broadcast %10 : vector<48x1xf32> to vector<48x128xf32>
    %12 = vector.broadcast %9 : vector<1x128xf32> to vector<48x128xf32>
    %13 = arith.mulf %11, %12 : vector<48x128xf32>
    %cst_5 = arith.constant 1.000000e+00 : f32
    %14 = vector.broadcast %cst_5 : f32 to vector<48x128xf32>
    %15 = arith.addf %14, %13 : vector<48x128xf32>
    %c0_6 = arith.constant 0 : index
    %c0_7 = arith.constant 0 : index
    %16 = vector.load %arg9[%c0_6, %c0_7] : memref<48x32xf32, #tpu.memory_space<vmem>>, vector<48x32xf32>
    %c0_8 = arith.constant 0 : index
    %c0_9 = arith.constant 0 : index
    %c0_10 = arith.constant 0 : index
    %17 = vector.load %arg5[%c0_8, %c0_9, %c0_10] : memref<1x32x128xf32, #tpu.memory_space<vmem>>, vector<1x32x128xf32>
    %18 = vector.shape_cast %17 : vector<1x32x128xf32> to vector<32x128xf32>
    %cst_11 = arith.constant dense<0.000000e+00> : vector<48x128xf32>
    %19 = tpu.matmul %16, %18, %cst_11 {dimension_numbers = #tpu.dot_dimension_numbers<[1], [0], [0], [1], [0, 0, 1, 1], [], []>} : vector<48x32xf32>, vector<32x128xf32>, vector<48x128xf32> -> vector<48x128xf32>
    %c0_12 = arith.constant 0 : index
    %c0_13 = arith.constant 0 : index
    %20 = vector.load %arg10[%c0_12, %c0_13] : memref<48x1xf32, #tpu.memory_space<vmem>>, vector<48x1xf32>
    %21 = vector.broadcast %20 : vector<48x1xf32> to vector<48x128xf32>
    %22 = arith.addf %19, %21 : vector<48x128xf32>
    %23 = arith.mulf %22, %15 : vector<48x128xf32>
    %24 = vector.extract_strided_slice %23 {offsets = [0, 0], sizes = [8, 128], strides = [1, 1]} : vector<48x128xf32> to vector<8x128xf32>
    %25 = vector.extract_strided_slice %23 {offsets = [8, 0], sizes = [40, 128], strides = [1, 1]} : vector<48x128xf32> to vector<40x128xf32>
    %c0_14 = arith.constant 0 : index
    %c0_15 = arith.constant 0 : index
    %26 = vector.load %arg14[%c0_14, %c0_15] : memref<8x128xf32, #tpu.memory_space<vmem>>, vector<8x128xf32>
    %cst_16 = arith.constant dense<0.000000e+00> : vector<128x128xf32>
    %27 = tpu.matmul %24, %26, %cst_16 {dimension_numbers = #tpu.dot_dimension_numbers<[0], [0], [1], [1], [0, 1, 1, 1], [], []>} : vector<8x128xf32>, vector<8x128xf32>, vector<128x128xf32> -> vector<128x128xf32>
    %c0_17 = arith.constant 0 : index
    %c0_18 = arith.constant 0 : index
    %28 = vector.load %arg15[%c0_17, %c0_18] : memref<1x128xf32, #tpu.memory_space<vmem>>, vector<1x128xf32>
    %cst_19 = arith.constant dense<0xFF800000> : vector<128xf32>
    %29 = vector.multi_reduction <maximumf>, %27, %cst_19 [0] : vector<128x128xf32> to vector<128xf32>
    %30 = vector.shape_cast %29 : vector<128xf32> to vector<1x128xf32>
    %31 = arith.maximumf %28, %30 : vector<1x128xf32>
    %32 = arith.subf %28, %31 : vector<1x128xf32>
    %33 = math.exp %32 : vector<1x128xf32>
    %34 = vector.broadcast %31 : vector<1x128xf32> to vector<128x128xf32>
    %35 = arith.subf %27, %34 : vector<128x128xf32>
    %36 = math.exp %35 : vector<128x128xf32>
    %c0_20 = arith.constant 0 : index
    %c0_21 = arith.constant 0 : index
    %37 = vector.load %arg16[%c0_20, %c0_21] : memref<40x128xf32, #tpu.memory_space<vmem>>, vector<40x128xf32>
    %38 = vector.broadcast %33 : vector<1x128xf32> to vector<40x128xf32>
    %39 = arith.mulf %38, %37 : vector<40x128xf32>
    %cst_22 = arith.constant dense<0.000000e+00> : vector<40x128xf32>
    %40 = tpu.matmul %25, %36, %cst_22 {dimension_numbers = #tpu.dot_dimension_numbers<[1], [0], [0], [1], [0, 0, 1, 1], [], []>} : vector<40x128xf32>, vector<128x128xf32>, vector<40x128xf32> -> vector<40x128xf32>
    %41 = arith.addf %39, %40 : vector<40x128xf32>
    %c0_23 = arith.constant 0 : index
    %c0_24 = arith.constant 0 : index
    %42 = vector.load %arg16[%c0_23, %c0_24] : memref<40x128xf32, #tpu.memory_space<vmem>>, vector<40x128xf32>
    tpu.vector_store %arg16[%c0_23, %c0_24], %41 {strides = array<i32>} : memref<40x128xf32, #tpu.memory_space<vmem>>, vector<40x128xf32>,
    %c0_25 = arith.constant 0 : index
    %c0_26 = arith.constant 0 : index
    %43 = vector.load %arg15[%c0_25, %c0_26] : memref<1x128xf32, #tpu.memory_space<vmem>>, vector<1x128xf32>
    tpu.vector_store %arg15[%c0_25, %c0_26], %31 {strides = array<i32>} : memref<1x128xf32, #tpu.memory_space<vmem>>, vector<1x128xf32>,
    %c1_i32 = arith.constant 1 : i32
    %44 = arith.cmpi eq, %arg2, %c1_i32 : i32
    %45 = arith.extui %44 : i1 to i32
    %c0_i32_27 = arith.constant 0 : i32
    %46 = arith.cmpi ne, %45, %c0_i32_27 : i32
    scf.if %46 {
      %c0_28 = arith.constant 0 : index
      %c0_29 = arith.constant 0 : index
      %47 = vector.load %arg16[%c0_28, %c0_29] : memref<40x128xf32, #tpu.memory_space<vmem>>, vector<40x128xf32>
      %48 = vector.extract_strided_slice %47 {offsets = [32, 0], sizes = [1, 128], strides = [1, 1]} : vector<40x128xf32> to vector<1x128xf32>
      %49 = tpu.reciprocal %48 : vector<1x128xf32> -> vector<1x128xf32>
      %c0_30 = arith.constant 0 : index
      %c0_31 = arith.constant 0 : index
      %50 = memref.load %arg12[%c0_30, %c0_31] : memref<1x1xf32, #tpu.memory_space<smem>>
      %51 = vector.extract_strided_slice %47 {offsets = [0, 0], sizes = [32, 128], strides = [1, 1]} : vector<40x128xf32> to vector<32x128xf32>
      %52 = vector.broadcast %49 : vector<1x128xf32> to vector<32x128xf32>
      %53 = arith.mulf %51, %52 : vector<32x128xf32>
      %54 = vector.broadcast %50 : f32 to vector<32x128xf32>
      %55 = arith.mulf %54, %53 : vector<32x128xf32>
      %c0_32 = arith.constant 0 : index
      %c0_33 = arith.constant 0 : index
      %c0_34 = arith.constant 0 : index
      %56 = vector.load %arg3[%c0_32, %c0_33, %c0_34] : memref<1x32x128xf32, #tpu.memory_space<vmem>>, vector<1x32x128xf32>
      %57 = vector.shape_cast %56 : vector<1x32x128xf32> to vector<32x128xf32>
      %58 = arith.addf %55, %57 : vector<32x128xf32>
      %c0_35 = arith.constant 0 : index
      %c0_36 = arith.constant 0 : index
      %c0_37 = arith.constant 0 : index
      %59 = vector.load %arg13[%c0_35, %c0_36, %c0_37] : memref<1x32x128xf32, #tpu.memory_space<vmem>>, vector<1x32x128xf32>
      %60 = vector.shape_cast %59 : vector<1x32x128xf32> to vector<32x128xf32>
      %61 = vector.shape_cast %58 : vector<32x128xf32> to vector<1x32x128xf32>
      tpu.vector_store %arg13[%c0_35, %c0_36, %c0_37], %61 {strides = array<i32>} : memref<1x32x128xf32, #tpu.memory_space<vmem>>, vector<1x32x128xf32>,
    } else {
    }
    return
  }
  func.func @transform_0(%arg0: i32, %arg1: i32, %arg2: i32) -> (i32, i32, i32) {
    %c0_i32 = arith.constant 0 : i32
    %c0_i32_0 = arith.constant 0 : i32
    return %arg0, %c0_i32, %arg1 : i32, i32, i32
  }
  func.func @transform_1(%arg0: i32, %arg1: i32, %arg2: i32) -> (i32, i32, i32) {
    %c0_i32 = arith.constant 0 : i32
    %c0_i32_0 = arith.constant 0 : i32
    return %arg0, %c0_i32, %arg1 : i32, i32, i32
  }
  func.func @transform_2(%arg0: i32, %arg1: i32, %arg2: i32) -> (i32, i32, i32) {
    %c0_i32 = arith.constant 0 : i32
    %c0_i32_0 = arith.constant 0 : i32
    return %arg0, %c0_i32, %arg2 : i32, i32, i32
  }
  func.func @transform_3(%arg0: i32, %arg1: i32, %arg2: i32) -> (i32, i32, i32) {
    %c0_i32 = arith.constant 0 : i32
    %c0_i32_0 = arith.constant 0 : i32
    return %arg0, %c0_i32, %arg2 : i32, i32, i32
  }
  func.func @transform_4(%arg0: i32, %arg1: i32, %arg2: i32) -> (i32, i32) {
    %c0_i32 = arith.constant 0 : i32
    %c0_i32_0 = arith.constant 0 : i32
    %c0_i32_1 = arith.constant 0 : i32
    return %c0_i32, %c0_i32_0 : i32, i32
  }
  func.func @transform_5(%arg0: i32, %arg1: i32, %arg2: i32) -> (i32, i32) {
    %c0_i32 = arith.constant 0 : i32
    %c0_i32_0 = arith.constant 0 : i32
    %c0_i32_1 = arith.constant 0 : i32
    return %c0_i32, %c0_i32_0 : i32, i32
  }
  func.func @transform_6(%arg0: i32, %arg1: i32, %arg2: i32) -> (i32, i32) {
    %c0_i32 = arith.constant 0 : i32
    %c0_i32_0 = arith.constant 0 : i32
    %c0_i32_1 = arith.constant 0 : i32
    return %c0_i32, %c0_i32_0 : i32, i32
  }
  func.func @transform_7(%arg0: i32, %arg1: i32, %arg2: i32) -> (i32, i32) {
    %c0_i32 = arith.constant 0 : i32
    %c0_i32_0 = arith.constant 0 : i32
    %c0_i32_1 = arith.constant 0 : i32
    return %c0_i32, %c0_i32_0 : i32, i32
  }
  func.func @transform_8(%arg0: i32, %arg1: i32, %arg2: i32) -> (i32, i32) {
    %c0_i32 = arith.constant 0 : i32
    %c0_i32_0 = arith.constant 0 : i32
    %c0_i32_1 = arith.constant 0 : i32
    return %c0_i32, %c0_i32_0 : i32, i32
  }
  func.func @transform_9(%arg0: i32, %arg1: i32, %arg2: i32) -> (i32, i32) {
    %c0_i32 = arith.constant 0 : i32
    %c0_i32_0 = arith.constant 0 : i32
    %c0_i32_1 = arith.constant 0 : i32
    return %c0_i32, %c0_i32_0 : i32, i32
  }
  func.func @transform_10(%arg0: i32, %arg1: i32, %arg2: i32) -> (i32, i32, i32) {
    %c0_i32 = arith.constant 0 : i32
    %c0_i32_0 = arith.constant 0 : i32
    return %arg0, %c0_i32, %arg1 : i32, i32, i32
  }
}

</mosaic_0001>

<llo_original>
// kernel: tpu_custom_call.1
$region0: #{tpu_custom_call.1}
  #allocation0 [shape = 'u32[]', space=smem, size = 0x4, offset = 0x4, fixed_abs, tag = 'smem constant byte address 0x4 - core index']
  #allocation1 [shape = 'u32[144,128]{1,0:T(1,128)}', space=vmem, size = 0x12000, scoped, tag = 'internal scratch']
  #allocation2 [shape = 'f32[8,128]{1,0:T(8,128)}', space=vmem, size = 0x1000, scoped, tag = 'scratch operand']
  #allocation3 [shape = 'f32[1,128]{1,0:T(1,128)}', space=vmem, size = 0x200, scoped, tag = 'scratch operand']
  #allocation4 [shape = 'f32[40,128]{1,0:T(8,128)}', space=vmem, size = 0x5000, scoped, tag = 'scratch operand']
  #allocation5 [shape = 'f32[1,1]{1,0:T(1,128)S(6)}', space=smem, size = 0x200, scoped, tag = 'scoped memory for tpu_custom_call.1']
  %s0 = inlined_call_operand.vmem [shape: f32[2,32,256], index: 0, kind: input, shape index: {}]
  %s1 = inlined_call_operand.vmem [shape: f32[2,1,256], index: 1, kind: input, shape index: {}]
  %s2 = inlined_call_operand.hbm [shape: f32[2,32,256], index: 2, kind: input, shape index: {}]
  %s3 = inlined_call_operand.vmem [shape: f32[2,1,256], index: 3, kind: input, shape index: {}]
  %s4 = inlined_call_operand.vmem [shape: f32[8,32], index: 4, kind: input, shape index: {}]
  %s5 = inlined_call_operand.vmem [shape: f32[8,1], index: 5, kind: input, shape index: {}]
  %s6 = inlined_call_operand.vmem [shape: f32[48,32], index: 6, kind: input, shape index: {}]
  %s7 = inlined_call_operand.vmem [shape: f32[48,1], index: 7, kind: input, shape index: {}]
  %s8 = inlined_call_operand.vmem [shape: f32[48,1], index: 8, kind: input, shape index: {}]
  %s9 = inlined_call_operand.<no memory space> [shape: f32[1,1], index: 9, kind: input, shape index: {}]
  %s10 = inlined_call_operand.hbm [shape: f32[2,32,256], index: 10, kind: output, shape index: {}]
  %s11 = sld [smem:[#allocation0]]
  $region123: #{tpu_custom_call.1} parent=0
    _
  %s13 = ssub.s32 1, %s11
  %s14 = scalar_select 0, %s13, %s11
  %15 = sst [smem:[#allocation5]] %s9
  $region1: #{tpu_custom_call.1} parent=0
    #allocation6 [shape = 'u8[32768]{0}', space=vmem, size = 0x8000, scoped, tag = 'input window, operand 0']
    #allocation7 [shape = 'u8[32768]{0}', space=vmem, size = 0x8000, scoped, tag = 'input window, operand 2']
    #allocation8 [shape = 's32[2]{0}', space=sflag, size = 0x8, scoped, tag = 'scoped memory for tpu_custom_call.1']
    #allocation9 [shape = 's32[2]{0}', space=sflag, size = 0x8, scoped, tag = 'scoped memory for tpu_custom_call.1']
    #allocation10 [shape = 'u8[32768]{0}', space=vmem, size = 0x8000, scoped, tag = 'output window, operand 0']
    %16 = vsyncpa [#allocation8], 0
    %s17 = scalar_lea.sflag [#allocation8], 1
    %18 = vsyncpa %s17, 0
    %19 = vsyncpa [#allocation9], 0
    %s20 = scalar_lea.sflag [#allocation9], 1
    %21 = vsyncpa %s20, 0
    loop: start=0, step=1, limit=10
    $region2: #{tpu_custom_call.1} parent=1 // loop_pre_header
      _
    $region3: #{tpu_custom_call.1} parent=1 // loop_header
      %s23 = sphi 0, %s27
      %p24 = scmp.ge.s32.totalorder %s23, 10
      %s30 = sphi 0, %s49
      %s31 = sphi 0, %s45
      %s32 = sphi 0, %s41
      %s33 = sphi 0, %s30
      %s34 = sphi 0, %s31
      %s35 = sphi 0, %s32
      %s36 = sphi 0, %s33
      %s37 = sphi 0, %s34
      %s38 = sphi 0, %s35
      %s54 = sphi 0, %s56
      %s57 = sphi 0, %s54
      %s58 = sphi 0, %s57
      %s74 = sphi 0, %s58
      %s82 = sphi 0, %s84
      %s85 = sphi 0, %s82
      %s86 = sphi 0, %s85
      %s102 = sphi 0, %s86
      %s110 = sphi 0, %s112
      %s113 = sphi 0, %s110
      %s114 = sphi 0, %s113
      %s130 = sphi 0, %s114
      %s138 = sphi 0, %s140
      %s141 = sphi 0, %s138
      %s142 = sphi 0, %s141
      %s158 = sphi 0, %s142
      %s162 = sphi 0, %s162
      %s164 = sphi 0, %s162
      %s165 = sphi 0, %s164
      %s179 = sphi 0, %s165
      %s183 = sphi 0, %s183
      %s185 = sphi 0, %s183
      %s186 = sphi 0, %s185
      %s200 = sphi 0, %s186
      %s204 = sphi 0, %s204
      %s206 = sphi 0, %s204
      %s207 = sphi 0, %s206
      %s221 = sphi 0, %s207
      %s225 = sphi 0, %s225
      %s227 = sphi 0, %s225
      %s228 = sphi 0, %s227
      %s242 = sphi 0, %s228
      %s246 = sphi 0, %s246
      %s248 = sphi 0, %s246
      %s249 = sphi 0, %s248
      %s263 = sphi 0, %s249
      %s267 = sphi 0, %s267
      %s269 = sphi 0, %s267
      %s270 = sphi 0, %s269
      %s284 = sphi 0, %s270
      %s292 = sphi 0, %s294
      %s295 = sphi 0, %s292
      %s296 = sphi 0, %s295
      %s312 = sphi 0, %s296
    $region4: #{tpu_custom_call.1} parent=1 // loop_header_branch
      %26 = sbr.rel (%p24) target = $region8
    $region5: #{tpu_custom_call.1} parent=1 // loop_body
      %s28 = ssub.s32 %s23, 1
      %s29 = ssub.s32 %s23, 2
      %s39 = sadd.s32 1, %s32
      %p40 = scmp.ge.s32.totalorder %s39, 2
      %s41 = scalar_select %p40, 0, %s39
      %s42 = sadd.s32 1, %s31
      %s43 = scalar_select %p40, %s42, %s31
      %p44 = scmp.ge.s32.totalorder %s43, 2
      %s45 = scalar_select %p44, 0, %s43
      %s46 = sadd.s32 1, %s30
      %s47 = scalar_select %p44, %s46, %s30
      %p48 = scmp.ge.s32.totalorder %s47, 2
      %s49 = scalar_select %p48, 0, %s47
      %s50 = ssub.s32 %s30, %s49
      %s51 = ssub.s32 %s31, %s45
      %s52 = sor.u32 %s50, %s51
      %p53 = scmp.eq.s32.totalorder %s52, 0
      %s55 = sadd.s32 %s54, 1
      %s56 = scalar_select %p53, %s54, %s55
      %p59 = pneg %p53
      %p60 = scmp.eq.s32.totalorder %s23, 7
      %p61 = por %p59, %p60
      %p62 = scmp.ne.s32.totalorder %s54, %s57
      %p63 = scmp.eq.s32.totalorder %s23, 0
      %p64 = por %p62, %p63
      %p65 = scmp.ne.s32.totalorder %s54, %s57
      %p66 = scmp.eq.s32.totalorder %s28, 7
      %p67 = por %p65, %p66
      %p68 = scmp.ne.s32.totalorder %s57, %s58
      %p69 = scmp.eq.s32.totalorder %s28, 0
      %p70 = por %p68, %p69
      %p71 = scmp.ne.s32.totalorder %s57, %s58
      %p72 = scmp.eq.s32.totalorder %s29, 7
      %p73 = por %p71, %p72
      %p75 = scmp.ne.s32.totalorder %s58, %s74
      %p76 = scmp.eq.s32.totalorder %s29, 0
      %p77 = por %p75, %p76
      %s78 = ssub.s32 %s30, %s49
      %s79 = ssub.s32 %s31, %s45
      %s80 = sor.u32 %s78, %s79
      %p81 = scmp.eq.s32.totalorder %s80, 0
      %s83 = sadd.s32 %s82, 1
      %s84 = scalar_select %p81, %s82, %s83
      %p87 = pneg %p81
      %p88 = scmp.eq.s32.totalorder %s23, 7
      %p89 = por %p87, %p88
      %p90 = scmp.ne.s32.totalorder %s82, %s85
      %p91 = scmp.eq.s32.totalorder %s23, 0
      %p92 = por %p90, %p91
      %p93 = scmp.ne.s32.totalorder %s82, %s85
      %p94 = scmp.eq.s32.totalorder %s28, 7
      %p95 = por %p93, %p94
      %p96 = scmp.ne.s32.totalorder %s85, %s86
      %p97 = scmp.eq.s32.totalorder %s28, 0
      %p98 = por %p96, %p97
      %p99 = scmp.ne.s32.totalorder %s85, %s86
      %p100 = scmp.eq.s32.totalorder %s29, 7
      %p101 = por %p99, %p100
      %p103 = scmp.ne.s32.totalorder %s86, %s102
      %p104 = scmp.eq.s32.totalorder %s29, 0
      %p105 = por %p103, %p104
      %s106 = ssub.s32 %s30, %s49
      %s107 = ssub.s32 %s32, %s41
      %s108 = sor.u32 %s106, %s107
      %p109 = scmp.eq.s32.totalorder %s108, 0
      %s111 = sadd.s32 %s110, 1
      %s112 = scalar_select %p109, %s110, %s111
      %p115 = pneg %p109
      %p116 = scmp.eq.s32.totalorder %s23, 7
      %p117 = por %p115, %p116
      %p118 = scmp.ne.s32.totalorder %s110, %s113
      %p119 = scmp.eq.s32.totalorder %s23, 0
      %p120 = por %p118, %p119
      %p121 = scmp.ne.s32.totalorder %s110, %s113
      %p122 = scmp.eq.s32.totalorder %s28, 7
      %p123 = por %p121, %p122
      %p124 = scmp.ne.s32.totalorder %s113, %s114
      %p125 = scmp.eq.s32.totalorder %s28, 0
      %p126 = por %p124, %p125
      %p127 = scmp.ne.s32.totalorder %s113, %s114
      %p128 = scmp.eq.s32.totalorder %s29, 7
      %p129 = por %p127, %p128
      %p131 = scmp.ne.s32.totalorder %s114, %s130
      %p132 = scmp.eq.s32.totalorder %s29, 0
      %p133 = por %p131, %p132
      %s134 = ssub.s32 %s30, %s49
      %s135 = ssub.s32 %s32, %s41
      %s136 = sor.u32 %s134, %s135
      %p137 = scmp.eq.s32.totalorder %s136, 0
      %s139 = sadd.s32 %s138, 1
      %s140 = scalar_select %p137, %s138, %s139
      %p143 = pneg %p137
      %p144 = scmp.eq.s32.totalorder %s23, 7
      %p145 = por %p143, %p144
      %p146 = scmp.ne.s32.totalorder %s138, %s141
      %p147 = scmp.eq.s32.totalorder %s23, 0
      %p148 = por %p146, %p147
      %p149 = scmp.ne.s32.totalorder %s138, %s141
      %p150 = scmp.eq.s32.totalorder %s28, 7
      %p151 = por %p149, %p150
      %p152 = scmp.ne.s32.totalorder %s141, %s142
      %p153 = scmp.eq.s32.totalorder %s28, 0
      %p154 = por %p152, %p153
      %p155 = scmp.ne.s32.totalorder %s141, %s142
      %p156 = scmp.eq.s32.totalorder %s29, 7
      %p157 = por %p155, %p156
      %p159 = scmp.ne.s32.totalorder %s142, %s158
      %p160 = scmp.eq.s32.totalorder %s29, 0
      %p161 = por %p159, %p160
      %s163 = sadd.s32 %s162, 1
      %p166 = scmp.eq.s32.totalorder %s23, 7
      %p167 = scmp.ne.s32.totalorder %s162, %s164
      %p168 = scmp.eq.s32.totalorder %s23, 0
      %p169 = por %p167, %p168
      %p170 = scmp.ne.s32.totalorder %s162, %s164
      %p171 = scmp.eq.s32.totalorder %s28, 7
      %p172 = por %p170, %p171
      %p173 = scmp.ne.s32.totalorder %s164, %s165
      %p174 = scmp.eq.s32.totalorder %s28, 0
      %p175 = por %p173, %p174
      %p176 = scmp.ne.s32.totalorder %s164, %s165
      %p177 = scmp.eq.s32.totalorder %s29, 7
      %p178 = por %p176, %p177
      %p180 = scmp.ne.s32.totalorder %s165, %s179
      %p181 = scmp.eq.s32.totalorder %s29, 0
      %p182 = por %p180, %p181
      %s184 = sadd.s32 %s183, 1
      %p187 = scmp.eq.s32.totalorder %s23, 7
      %p188 = scmp.ne.s32.totalorder %s183, %s185
      %p189 = scmp.eq.s32.totalorder %s23, 0
      %p190 = por %p188, %p189
      %p191 = scmp.ne.s32.totalorder %s183, %s185
      %p192 = scmp.eq.s32.totalorder %s28, 7
      %p193 = por %p191, %p192
      %p194 = scmp.ne.s32.totalorder %s185, %s186
      %p195 = scmp.eq.s32.totalorder %s28, 0
      %p196 = por %p194, %p195
      %p197 = scmp.ne.s32.totalorder %s185, %s186
      %p198 = scmp.eq.s32.totalorder %s29, 7
      %p199 = por %p197, %p198
      %p201 = scmp.ne.s32.totalorder %s186, %s200
      %p202 = scmp.eq.s32.totalorder %s29, 0
      %p203 = por %p201, %p202
      %s205 = sadd.s32 %s204, 1
      %p208 = scmp.eq.s32.totalorder %s23, 7
      %p209 = scmp.ne.s32.totalorder %s204, %s206
      %p210 = scmp.eq.s32.totalorder %s23, 0
      %p211 = por %p209, %p210
      %p212 = scmp.ne.s32.totalorder %s204, %s206
      %p213 = scmp.eq.s32.totalorder %s28, 7
      %p214 = por %p212, %p213
      %p215 = scmp.ne.s32.totalorder %s206, %s207
      %p216 = scmp.eq.s32.totalorder %s28, 0
      %p217 = por %p215, %p216
      %p218 = scmp.ne.s32.totalorder %s206, %s207
      %p219 = scmp.eq.s32.totalorder %s29, 7
      %p220 = por %p218, %p219
      %p222 = scmp.ne.s32.totalorder %s207, %s221
      %p223 = scmp.eq.s32.totalorder %s29, 0
      %p224 = por %p222, %p223
      %s226 = sadd.s32 %s225, 1
      %p229 = scmp.eq.s32.totalorder %s23, 7
      %p230 = scmp.ne.s32.totalorder %s225, %s227
      %p231 = scmp.eq.s32.totalorder %s23, 0
      %p232 = por %p230, %p231
      %p233 = scmp.ne.s32.totalorder %s225, %s227
      %p234 = scmp.eq.s32.totalorder %s28, 7
      %p235 = por %p233, %p234
      %p236 = scmp.ne.s32.totalorder %s227, %s228
      %p237 = scmp.eq.s32.totalorder %s28, 0
      %p238 = por %p236, %p237
      %p239 = scmp.ne.s32.totalorder %s227, %s228
      %p240 = scmp.eq.s32.totalorder %s29, 7
      %p241 = por %p239, %p240
      %p243 = scmp.ne.s32.totalorder %s228, %s242
      %p244 = scmp.eq.s32.totalorder %s29, 0
      %p245 = por %p243, %p244
      %s247 = sadd.s32 %s246, 1
      %p250 = scmp.eq.s32.totalorder %s23, 7
      %p251 = scmp.ne.s32.totalorder %s246, %s248
      %p252 = scmp.eq.s32.totalorder %s23, 0
      %p253 = por %p251, %p252
      %p254 = scmp.ne.s32.totalorder %s246, %s248
      %p255 = scmp.eq.s32.totalorder %s28, 7
      %p256 = por %p254, %p255
      %p257 = scmp.ne.s32.totalorder %s248, %s249
      %p258 = scmp.eq.s32.totalorder %s28, 0
      %p259 = por %p257, %p258
      %p260 = scmp.ne.s32.totalorder %s248, %s249
      %p261 = scmp.eq.s32.totalorder %s29, 7
      %p262 = por %p260, %p261
      %p264 = scmp.ne.s32.totalorder %s249, %s263
      %p265 = scmp.eq.s32.totalorder %s29, 0
      %p266 = por %p264, %p265
      %s268 = sadd.s32 %s267, 1
      %p271 = scmp.eq.s32.totalorder %s23, 7
      %p272 = scmp.ne.s32.totalorder %s267, %s269
      %p273 = scmp.eq.s32.totalorder %s23, 0
      %p274 = por %p272, %p273
      %p275 = scmp.ne.s32.totalorder %s267, %s269
      %p276 = scmp.eq.s32.totalorder %s28, 7
      %p277 = por %p275, %p276
      %p278 = scmp.ne.s32.totalorder %s269, %s270
      %p279 = scmp.eq.s32.totalorder %s28, 0
      %p280 = por %p278, %p279
      %p281 = scmp.ne.s32.totalorder %s269, %s270
      %p282 = scmp.eq.s32.totalorder %s29, 7
      %p283 = por %p281, %p282
      %p285 = scmp.ne.s32.totalorder %s270, %s284
      %p286 = scmp.eq.s32.totalorder %s29, 0
      %p287 = por %p285, %p286
      %s288 = ssub.s32 %s30, %s49
      %s289 = ssub.s32 %s31, %s45
      %s290 = sor.u32 %s288, %s289
      %p291 = scmp.eq.s32.totalorder %s290, 0
      %s293 = sadd.s32 %s292, 1
      %s294 = scalar_select %p291, %s292, %s293
      %p297 = pneg %p291
      %p298 = scmp.eq.s32.totalorder %s23, 7
      %p299 = por %p297, %p298
      %p300 = scmp.ne.s32.totalorder %s292, %s295
      %p301 = scmp.eq.s32.totalorder %s23, 0
      %p302 = por %p300, %p301
      %p303 = scmp.ne.s32.totalorder %s292, %s295
      %p304 = scmp.eq.s32.totalorder %s28, 7
      %p305 = por %p303, %p304
      %p306 = scmp.ne.s32.totalorder %s295, %s296
      %p307 = scmp.eq.s32.totalorder %s28, 0
      %p308 = por %p306, %p307
      %p309 = scmp.ne.s32.totalorder %s295, %s296
      %p310 = scmp.eq.s32.totalorder %s29, 7
      %p311 = por %p309, %p310
      %p313 = scmp.ne.s32.totalorder %s296, %s312
      %p314 = scmp.eq.s32.totalorder %s29, 0
      %p315 = por %p313, %p314
      %p316 = scmp.le.s32.totalorder 1, %s23
      %p317 = scmp.lt.s32.totalorder %s23, 9
      %p318 = pnand %p316, %p317
      %p319 = pneg %p318
      // Predicated region
      $region9: #{tpu_custom_call.1} parent=5 // pred_check
        _
      $region10: #{tpu_custom_call.1} parent=5 // pred_check_branch
        %321 = sbr.rel (%p318) target = $region12
      $region11: #{tpu_custom_call.1} parent=5 // pred_region
        %s322 = ssub.s32 %s23, 1
        // Predicated region
        $region13: #{tpu_custom_call.1} parent=11 // pred_check
          %p323 = pneg %p175
        $region14: #{tpu_custom_call.1} parent=11 // pred_check_branch
          %325 = sbr.rel (%p323) target = $region16
        $region15: #{tpu_custom_call.1} parent=11 // pred_region
          _
        $region16: #{tpu_custom_call.1} parent=11 // pred_fallthru
          _
        // Predicated region
        $region17: #{tpu_custom_call.1} parent=11 // pred_check
          %p326 = pneg %p196
        $region18: #{tpu_custom_call.1} parent=11 // pred_check_branch
          %328 = sbr.rel (%p326) target = $region20
        $region19: #{tpu_custom_call.1} parent=11 // pred_region
          _
        $region20: #{tpu_custom_call.1} parent=11 // pred_fallthru
          _
        // Predicated region
        $region21: #{tpu_custom_call.1} parent=11 // pred_check
          %p329 = pneg %p217
        $region22: #{tpu_custom_call.1} parent=11 // pred_check_branch
          %331 = sbr.rel (%p329) target = $region24
        $region23: #{tpu_custom_call.1} parent=11 // pred_region
          _
        $region24: #{tpu_custom_call.1} parent=11 // pred_fallthru
          _
        // Predicated region
        $region25: #{tpu_custom_call.1} parent=11 // pred_check
          %p332 = pneg %p238
        $region26: #{tpu_custom_call.1} parent=11 // pred_check_branch
          %334 = sbr.rel (%p332) target = $region28
        $region27: #{tpu_custom_call.1} parent=11 // pred_region
          _
        $region28: #{tpu_custom_call.1} parent=11 // pred_fallthru
          _
        // Predicated region
        $region29: #{tpu_custom_call.1} parent=11 // pred_check
          %p335 = pneg %p259
        $region30: #{tpu_custom_call.1} parent=11 // pred_check_branch
          %337 = sbr.rel (%p335) target = $region32
        $region31: #{tpu_custom_call.1} parent=11 // pred_region
          _
        $region32: #{tpu_custom_call.1} parent=11 // pred_fallthru
          _
        // Predicated region
        $region33: #{tpu_custom_call.1} parent=11 // pred_check
          %p338 = pneg %p280
        $region34: #{tpu_custom_call.1} parent=11 // pred_check_branch
          %340 = sbr.rel (%p338) target = $region36
        $region35: #{tpu_custom_call.1} parent=11 // pred_region
          _
        $region36: #{tpu_custom_call.1} parent=11 // pred_fallthru
          _
      $region12: #{tpu_custom_call.1} parent=5 // pred_fallthru
        _
      %p341 = scmp.lt.s32.totalorder %s23, 8
      // Predicated region
      $region37: #{tpu_custom_call.1} parent=5 // pred_check
        %p342 = pneg %p341
      $region38: #{tpu_custom_call.1} parent=5 // pred_check_branch
        %344 = sbr.rel (%p342) target = $region40
      $region39: #{tpu_custom_call.1} parent=5 // pred_region
        // Predicated region
        $region41: #{tpu_custom_call.1} parent=39 // pred_check
          %p345 = pneg %p64
        $region42: #{tpu_custom_call.1} parent=39 // pred_check_branch
          %347 = sbr.rel (%p345) target = $region44
        $region43: #{tpu_custom_call.1} parent=39 // pred_region
          %s348 = sand.u32 %s54, 1
          %s349 = sand.u32 %s54, 1
          %s350 = smul.addr %s349, 32
          %s351 = scalar_lea.vmem [#allocation6], %s350
          %s352 = smul.addr %s30, 8
          %s353 = sadd.s32 %s31, %s352
          %s354 = smul.addr %s353, 8
          %s355 = scalar_lea.vmem %s0, %s354
          // Predicated region
          $region45: #{tpu_custom_call.1} parent=43 // pred_check
            _
          $region46: #{tpu_custom_call.1} parent=43 // pred_check_branch
            %357 = sbr.rel (0) target = $region48
          $region47: #{tpu_custom_call.1} parent=43 // pred_region
            // Predicated region
            $region49: #{tpu_custom_call.1} parent=47 // pred_check
              _
            $region50: #{tpu_custom_call.1} parent=47 // pred_check_branch
              %359 = sbr.rel (0) target = $region52
            $region51: #{tpu_custom_call.1} parent=47 // pred_region
              // Predicated region
              $region64: #{tpu_custom_call.1} parent=51 // pred_check
                _
              $region65: #{tpu_custom_call.1} parent=51 // pred_check_branch
                %380 = sbr.rel (0) target = $region67
              $region66: #{tpu_custom_call.1} parent=51 // pred_region
                loop: start=0, step=1, limit=1
                $region68: #{tpu_custom_call.1} parent=66 // loop_pre_header
                  _
                $region69: #{tpu_custom_call.1} parent=66 // loop_header
                  %s382 = sphi 0, %s386
                  %p383 = scmp.ge.s32.totalorder %s382, 1
                  %s387 = sphi %s355, %s355
                  %s388 = sphi %s351, %s351
                $region70: #{tpu_custom_call.1} parent=66 // loop_header_branch
                  %385 = sbr.rel (%p383) target = $region74
                $region71: #{tpu_custom_call.1} parent=66 // loop_body
                  %v389 = vld [vmem:[%s387] sm:$0xff]
                  %390 = vst [vmem:[%s388] sm:$0xff] %v389
                  %v391 = vld [vmem:[%s387 + $0x10] sm:$0xff]
                  %392 = vst [vmem:[%s388 + $0x8] sm:$0xff] %v391
                  %v393 = vld [vmem:[%s387 + $0x20] sm:$0xff]
                  %394 = vst [vmem:[%s388 + $0x10] sm:$0xff] %v393
                  %v395 = vld [vmem:[%s387 + $0x30] sm:$0xff]
                  %396 = vst [vmem:[%s388 + $0x18] sm:$0xff] %v395
                $region72: #{tpu_custom_call.1} parent=66 // loop_footer
                  %s386 = sadd.s32 1, %s382
                $region73: #{tpu_custom_call.1} parent=66 // loop_footer_branch
                  %381 = sbr.rel target = $region69
                $region74: #{tpu_custom_call.1} parent=66 // loop_exit
                  _
              $region67: #{tpu_custom_call.1} parent=51 // pred_fallthru
                _
              // Predicated region
              $region75: #{tpu_custom_call.1} parent=51 // pred_check
                _
              $region76: #{tpu_custom_call.1} parent=51 // pred_check_branch
                %398 = sbr.rel target = $region78
              $region77: #{tpu_custom_call.1} parent=51 // pred_region
                _
              $region78: #{tpu_custom_call.1} parent=51 // pred_fallthru
                _
            $region52: #{tpu_custom_call.1} parent=47 // pred_fallthru
              _
            // Predicated region
            $region53: #{tpu_custom_call.1} parent=47 // pred_check
              _
            $region54: #{tpu_custom_call.1} parent=47 // pred_check_branch
              %361 = sbr.rel target = $region56
            $region55: #{tpu_custom_call.1} parent=47 // pred_region
              loop: start=0, step=1, limit=1
              $region57: #{tpu_custom_call.1} parent=55 // loop_pre_header
                _
              $region58: #{tpu_custom_call.1} parent=55 // loop_header
                %s364 = sphi 0, %s368
                %p365 = scmp.ge.s32.totalorder %s364, 1
                %s369 = sphi %s355, %s355
                %s370 = sphi %s351, %s351
              $region59: #{tpu_custom_call.1} parent=55 // loop_header_branch
                %367 = sbr.rel (%p365) target = $region63
              $region60: #{tpu_custom_call.1} parent=55 // loop_body
                %v371 = vld [vmem:[%s369] sm:$0xff]
                %372 = vst [vmem:[%s370] sm:$0xff] %v371
                %v373 = vld [vmem:[%s369 + $0x10] sm:$0xff]
                %374 = vst [vmem:[%s370 + $0x8] sm:$0xff] %v373
                %v375 = vld [vmem:[%s369 + $0x20] sm:$0xff]
                %376 = vst [vmem:[%s370 + $0x10] sm:$0xff] %v375
                %v377 = vld [vmem:[%s369 + $0x30] sm:$0xff]
                %378 = vst [vmem:[%s370 + $0x18] sm:$0xff] %v377
              $region61: #{tpu_custom_call.1} parent=55 // loop_footer
                %s368 = sadd.s32 1, %s364
              $region62: #{tpu_custom_call.1} parent=55 // loop_footer_branch
                %363 = sbr.rel target = $region58
              $region63: #{tpu_custom_call.1} parent=55 // loop_exit
                _
            $region56: #{tpu_custom_call.1} parent=47 // pred_fallthru
              _
          $region48: #{tpu_custom_call.1} parent=43 // pred_fallthru
            _
          %399 = vnop
        $region44: #{tpu_custom_call.1} parent=39 // pred_fallthru
          _
        // Predicated region
        $region79: #{tpu_custom_call.1} parent=39 // pred_check
          %p400 = pneg %p92
        $region80: #{tpu_custom_call.1} parent=39 // pred_check_branch
          %402 = sbr.rel (%p400) target = $region82
        $region81: #{tpu_custom_call.1} parent=39 // pred_region
          %p403 = scmp.lt.s32.totalorder %s30, 1
          %s404 = scalar_select %p403, %s30, 1
          %p405 = scmp.lt.s32.totalorder %s31, 1
          %s406 = scalar_select %p405, %s31, 1
          %s407 = smul.addr %s404, 2
          %s408 = sadd.s32 %s406, %s407
          %s409 = scalar_lea.vmem %s1, %s408
        $region82: #{tpu_custom_call.1} parent=39 // pred_fallthru
          _
        // Predicated region
        $region83: #{tpu_custom_call.1} parent=39 // pred_check
          %p410 = pneg %p120
        $region84: #{tpu_custom_call.1} parent=39 // pred_check_branch
          %412 = sbr.rel (%p410) target = $region86
        $region85: #{tpu_custom_call.1} parent=39 // pred_region
          %s413 = sand.u32 %s110, 1
          %s414 = scalar_lea.sflag [#allocation8], %s413
          %s415 = sand.u32 %s110, 1
          %s416 = smul.addr %s415, 32
          %s417 = scalar_lea.vmem [#allocation7], %s416
          %s419 = ssub.s32 512, 512
          %420 = vsyncadd %s414, %s419
          %s421 = smul.addr %s30, 8
          %s422 = sadd.s32 %s32, %s421
          %s423 = smul.addr %s422, 128
          %s424 = scalar_lea.hbm %s2, %s423
          %s425 = sshll.u32 %s417, 4
          %s426 = int_to_ptr.vmem [resolvable:$true] %s425
          %431 = dma.hbm_to_vmem [thread:$0]  %s424, 512, %s426, %s414, 256, 128, 8
        $region86: #{tpu_custom_call.1} parent=39 // pred_fallthru
          _
        // Predicated region
        $region87: #{tpu_custom_call.1} parent=39 // pred_check
          %p432 = pneg %p148
        $region88: #{tpu_custom_call.1} parent=39 // pred_check_branch
          %434 = sbr.rel (%p432) target = $region90
        $region89: #{tpu_custom_call.1} parent=39 // pred_region
          %p435 = scmp.lt.s32.totalorder %s30, 1
          %s436 = scalar_select %p435, %s30, 1
          %p437 = scmp.lt.s32.totalorder %s32, 1
          %s438 = scalar_select %p437, %s32, 1
          %s439 = smul.addr %s436, 2
          %s440 = sadd.s32 %s438, %s439
          %s441 = scalar_lea.vmem %s3, %s440
        $region90: #{tpu_custom_call.1} parent=39 // pred_fallthru
          _
      $region40: #{tpu_custom_call.1} parent=5 // pred_fallthru
        _
      %p442 = scmp.le.s32.totalorder 1, %s23
      %p443 = scmp.lt.s32.totalorder %s23, 9
      %p444 = pnand %p442, %p443
      %p445 = pneg %p444
      // Predicated region
      $region91: #{tpu_custom_call.1} parent=5 // pred_check
        _
      $region92: #{tpu_custom_call.1} parent=5 // pred_check_branch
        %447 = sbr.rel (%p444) target = $region94
      $region93: #{tpu_custom_call.1} parent=5 // pred_region
        %s448 = ssub.s32 %s23, 1
        %s449 = sand.u32 %s57, 1
        %s450 = sand.u32 %s57, 1
        %s451 = smul.addr %s450, 32
        %s452 = scalar_lea.vmem [#allocation6], %s451
        // Predicated region
        $region95: #{tpu_custom_call.1} parent=93 // pred_check
          %p453 = pneg %p70
        $region96: #{tpu_custom_call.1} parent=93 // pred_check_branch
          %455 = sbr.rel (%p453) target = $region98
        $region97: #{tpu_custom_call.1} parent=93 // pred_region
          _
        $region98: #{tpu_custom_call.1} parent=93 // pred_fallthru
          _
        %s456 = sand.u32 %s113, 1
        %s457 = scalar_lea.sflag [#allocation8], %s456
        %s458 = sand.u32 %s113, 1
        %s459 = smul.addr %s458, 32
        %s460 = scalar_lea.vmem [#allocation7], %s459
        // Predicated region
        $region99: #{tpu_custom_call.1} parent=93 // pred_check
          %p461 = pneg %p126
        $region100: #{tpu_custom_call.1} parent=93 // pred_check_branch
          %463 = sbr.rel (%p461) target = $region102
        $region101: #{tpu_custom_call.1} parent=93 // pred_region
          %464 = dma.done %s457, 512
        $region102: #{tpu_custom_call.1} parent=93 // pred_fallthru
          _
        %s465 = sand.u32 %s57, 1
        %s466 = sand.u32 %s57, 1
        %s467 = smul.addr %s466, 32
        %s468 = scalar_lea.vmem [#allocation6], %s467
        %p469 = pneg %p70
        %p470 = pneg %p67
        %p471 = scmp.lt.s32.totalorder %s33, 1
        %s472 = scalar_select %p471, %s33, 1
        %p473 = scmp.lt.s32.totalorder %s34, 1
        %s474 = scalar_select %p473, %s34, 1
        %s475 = smul.addr %s472, 2
        %s476 = sadd.s32 %s474, %s475
        %s477 = scalar_lea.vmem %s1, %s476
        %p478 = pneg %p98
        %p479 = pneg %p95
        %s480 = sand.u32 %s113, 1
        %s481 = scalar_lea.sflag [#allocation8], %s480
        %s482 = sand.u32 %s113, 1
        %s483 = smul.addr %s482, 32
        %s484 = scalar_lea.vmem [#allocation7], %s483
        %p485 = pneg %p126
        %p486 = pneg %p123
        %p487 = scmp.lt.s32.totalorder %s33, 1
        %s488 = scalar_select %p487, %s33, 1
        %p489 = scmp.lt.s32.totalorder %s35, 1
        %s490 = scalar_select %p489, %s35, 1
        %s491 = smul.addr %s488, 2
        %s492 = sadd.s32 %s490, %s491
        %s493 = scalar_lea.vmem %s3, %s492
        %p494 = pneg %p154
        %p495 = pneg %p151
        %p496 = pneg %p175
        %p497 = pneg %p172
        %p498 = pneg %p196
        %p499 = pneg %p193
        %p500 = pneg %p217
        %p501 = pneg %p214
        %p502 = pneg %p238
        %p503 = pneg %p235
        %p504 = pneg %p259
        %p505 = pneg %p256
        %p506 = pneg %p280
        %p507 = pneg %p277
        %p508 = pneg %p308
        %p509 = pneg %p305
        %s510 = sand.u32 %s295, 1
        %s511 = scalar_lea.sflag [#allocation9], %s510
        %s512 = sand.u32 %s295, 1
        %s513 = smul.addr %s512, 32
        %s514 = scalar_lea.vmem [#allocation10], %s513
        %p515 = scmp.lt.s32.totalorder %s33, 1
        %s516 = scalar_select %p515, %s33, 1
        %p517 = scmp.lt.s32.totalorder %s34, 1
        %s518 = scalar_select %p517, %s34, 1
        %s519 = smul.addr %s516, 2
        %s520 = sadd.s32 %s518, %s519
        %s521 = scalar_lea.vmem %s1, %s520
        %p522 = scmp.lt.s32.totalorder %s33, 1
        %s523 = scalar_select %p522, %s33, 1
        %p524 = scmp.lt.s32.totalorder %s35, 1
        %s525 = scalar_select %p524, %s35, 1
        %s526 = smul.addr %s523, 2
        %s527 = sadd.s32 %s525, %s526
        %s528 = scalar_lea.vmem %s3, %s527
        %p529 = scmp.eq.s32.totalorder %s35, 0
        // Predicated region
        $region103: #{tpu_custom_call.1} parent=93 // pred_check
          %p530 = pneg %p529
        $region104: #{tpu_custom_call.1} parent=93 // pred_check_branch
          %532 = sbr.rel (%p530) target = $region106
        $region105: #{tpu_custom_call.1} parent=93 // pred_region
          %v533 = vld [vmem:[%s452] sm:$0xff]
          %v534 = vld [vmem:[%s452 + $0x8] sm:$0xff]
          %v535 = vld [vmem:[%s452 + $0x10] sm:$0xff]
          %v536 = vld [vmem:[%s452 + $0x18] sm:$0xff]
          %v537 = vld [vmem:[%s521] sm:$0x1]
          %v538 = vxor.u32 %v537, 2147483648
          %v539 = vmul.f32 %v538, 1.442695
          %v540 = vpow.pop %v539
          %v541 = vadd.f32 %v540, 1.0
          %v542 = vrcp.pop %v541
          %v543 = vmul.f32 1.0, %v542
          %v544 = vadd.f32 %v543, 1.0
          %v545 = vld [vmem:[%s4] sm:$0xff]
          %v546 = vld [vmem:[%s5] sm:$0xff]
          %548 = vset.pattern.permute.xlu0 0
          %549 = vperm.xlu0 %548, %v546
          %v550 = vpop.permute.xlu0 %549
          %vm552 = vcmask 261120
          %v554 = vsel %vm552, %v545, 0
          %556 = vmatprep.subr.mxu0 0.0
          %557 = vmatpush1.msra.mxu0 %v533
          %558 = vmatprep.subr.mxu0 0.0
          %559 = vmatpush1.msra.mxu0 %v534
          %560 = vmatprep.subr.mxu0 0.0
          %561 = vmatpush1.msra.mxu0 %v535
          %562 = vmatprep.subr.mxu0 0.0
          %563 = vmatpush1.msra.mxu0 %v536
          %564 = vmatprep.subr.mxu0 0.0
          %565 = vmatpush1.msra.mxu0 0.0
          %566 = vmatprep.subr.mxu0 0.0
          %567 = vmatpush1.msra.mxu0 0.0
          %568 = vmatprep.subr.mxu0 0.0
          %569 = vmatpush1.msra.mxu0 0.0
          %570 = vmatprep.subr.mxu0 0.0
          %571 = vmatpush1.msra.mxu0 0.0
          %572 = vmatprep.subr.mxu0 0.0
          %573 = vmatpush1.msra.mxu0 0.0
          %574 = vmatprep.subr.mxu0 0.0
          %575 = vmatpush1.msra.mxu0 0.0
          %576 = vmatprep.subr.mxu0 0.0
          %577 = vmatpush1.msra.mxu0 0.0
          %578 = vmatprep.subr.mxu0 0.0
          %579 = vmatpush1.msra.mxu0 0.0
          %580 = vmatprep.subr.mxu0 0.0
          %581 = vmatpush1.msra.mxu0 0.0
          %582 = vmatprep.subr.mxu0 0.0
          %583 = vmatpush1.msra.mxu0 0.0
          %584 = vmatprep.subr.mxu0 0.0
          %585 = vmatpush1.msra.mxu0 0.0
          %586 = vmatprep.subr.mxu0 0.0
          %587 = vmatpush1.msra.mxu0 0.0
          %588 = vmatprep.subr.mxu0 0.0
          %589 = vmatpush1.msra.mxu0 0.0
          %590 = vmatprep.subr.mxu0 0.0
          %591 = vmatpush1.msra.mxu0 0.0
          %592 = vmatprep.subr.mxu0 0.0
          %593 = vmatpush1.msra.mxu0 0.0
          %594 = vmatprep.subr.mxu0 0.0
          %595 = vmatpush1.msra.mxu0 0.0
          %596 = vmatprep.subr.mxu0 0.0
          %597 = vmatpush1.msra.mxu0 0.0
          %598 = vmatprep.subr.mxu0 0.0
          %599 = vmatpush1.msra.mxu0 0.0
          %600 = vmatprep.subr.mxu0 0.0
          %601 = vmatpush1.msra.mxu0 0.0
          %602 = vmatprep.subr.mxu0 0.0
          %603 = vmatpush1.msra.mxu0 0.0
          %604 = vmatprep.subr.mxu0 0.0
          %605 = vmatpush1.msra.mxu0 0.0
          %606 = vmatprep.subr.mxu0 0.0
          %607 = vmatpush1.msra.mxu0 0.0
          %608 = vmatprep.subr.mxu0 0.0
          %609 = vmatpush1.msra.mxu0 0.0
          %610 = vmatprep.subr.mxu0 0.0
          %611 = vmatpush1.msra.mxu0 0.0
          %612 = vmatprep.subr.mxu0 0.0
          %613 = vmatpush1.msra.mxu0 0.0
          %614 = vmatprep.subr.mxu0 0.0
          %615 = vmatpush1.msra.mxu0 0.0
          %616 = vmatprep.subr.mxu0 0.0
          %617 = vmatpush1.msra.mxu0 0.0
          %618 = vmatprep.subr.mxu0 0.0
          %619 = vmatpush1.msra.mxu0 0.0
          %620 = vmatprep.mubr.f32.mxu0 0.0
          %621 = vmatmul.mubr.f32.gmra.mrb[0].mxu0 %v554
          %v622 = vpop.f32.mrb[0].mxu0
          %v623 = vadd.f32 %v550, %v622
          %v624 = vpop.f32.mrb[0].mxu0
          %625 = vdwg.mxu0
          %v627 = vlaneseq
          %v628 = vshrl.u32 %v627, 7
          %v629 = vsub.s32 0, %v628
          %v630 = vrot.slane %v544, %v629
          %v632 = vmul.f32 %v623, %v630
          %633 = vst [vmem:[#allocation2] sm:$0xff] %v632
          %634 = vst [vmem:[#allocation3] sm:$0x1] -inf
          %635 = vst [vmem:[#allocation4] sm:$0xff] 0.0
          %636 = vst [vmem:[#allocation4 + $0x8] sm:$0xff] 0.0
          %637 = vst [vmem:[#allocation4 + $0x10] sm:$0xff] 0.0
          %638 = vst [vmem:[#allocation4 + $0x18] sm:$0xff] 0.0
          %639 = vst [vmem:[#allocation4 + $0x20] sm:$0xff] 0.0
        $region106: #{tpu_custom_call.1} parent=93 // pred_fallthru
          _
        %v640 = vld [vmem:[%s528] sm:$0x1]
        %v641 = vxor.u32 %v640, 2147483648
        %v642 = vmul.f32 %v641, 1.442695
        %v643 = vpow.pop %v642
        %v644 = vadd.f32 %v643, 1.0
        %v645 = vrcp.pop %v644
        %v646 = vmul.f32 1.0, %v645
        %v647 = vld [vmem:[%s8] sm:$0xff]
        %v648 = vld [vmem:[%s8 + $0x8] sm:$0xff]
        %v649 = vld [vmem:[%s8 + $0x10] sm:$0xff]
        %v650 = vld [vmem:[%s8 + $0x18] sm:$0xff]
        %v651 = vld [vmem:[%s8 + $0x20] sm:$0xff]
        %v652 = vld [vmem:[%s8 + $0x28] sm:$0xff]
        %654 = vset.pattern.permute.xlu0 0
        %655 = vperm.xlu0 %654, %v647
        %v656 = vpop.permute.xlu0 %655
        %659 = vset.pattern.permute.xlu0 0
        %660 = vperm.xlu0 %659, %v648
        %v661 = vpop.permute.xlu0 %660
        %664 = vset.pattern.permute.xlu0 0
        %665 = vperm.xlu0 %664, %v649
        %v666 = vpop.permute.xlu0 %665
        %669 = vset.pattern.permute.xlu0 0
        %670 = vperm.xlu0 %669, %v650
        %v671 = vpop.permute.xlu0 %670
        %674 = vset.pattern.permute.xlu0 0
        %675 = vperm.xlu0 %674, %v651
        %v676 = vpop.permute.xlu0 %675
        %679 = vset.pattern.permute.xlu0 0
        %680 = vperm.xlu0 %679, %v652
        %v681 = vpop.permute.xlu0 %680
        %v684 = vlaneseq
        %v685 = vshrl.u32 %v684, 7
        %v686 = vsub.s32 0, %v685
        %v687 = vrot.slane %v646, %v686
        %v689 = vmul.f32 %v656, %v687
        %v690 = vmul.f32 %v661, %v687
        %v691 = vmul.f32 %v666, %v687
        %v692 = vmul.f32 %v671, %v687
        %v693 = vmul.f32 %v676, %v687
        %v694 = vmul.f32 %v681, %v687
        %v695 = vadd.f32 %v689, 1.0
        %v696 = vadd.f32 %v690, 1.0
        %v697 = vadd.f32 %v691, 1.0
        %v698 = vadd.f32 %v692, 1.0
        %v699 = vadd.f32 %v693, 1.0
        %v700 = vadd.f32 %v694, 1.0
        %v701 = vld [vmem:[%s6] sm:$0xff]
        %v702 = vld [vmem:[%s6 + $0x8] sm:$0xff]
        %v703 = vld [vmem:[%s6 + $0x10] sm:$0xff]
        %v704 = vld [vmem:[%s6 + $0x18] sm:$0xff]
        %v705 = vld [vmem:[%s6 + $0x20] sm:$0xff]
        %v706 = vld [vmem:[%s6 + $0x28] sm:$0xff]
        %v707 = vld [vmem:[%s460] sm:$0xff]
        %v708 = vld [vmem:[%s460 + $0x8] sm:$0xff]
        %v709 = vld [vmem:[%s460 + $0x10] sm:$0xff]
        %v710 = vld [vmem:[%s460 + $0x18] sm:$0xff]
        %v711 = vld [vmem:[%s7] sm:$0xff]
        %v712 = vld [vmem:[%s7 + $0x8] sm:$0xff]
        %v713 = vld [vmem:[%s7 + $0x10] sm:$0xff]
        %v714 = vld [vmem:[%s7 + $0x18] sm:$0xff]
        %v715 = vld [vmem:[%s7 + $0x20] sm:$0xff]
        %v716 = vld [vmem:[%s7 + $0x28] sm:$0xff]
        %718 = vset.pattern.permute.xlu0 0
        %719 = vperm.xlu0 %718, %v711
        %v720 = vpop.permute.xlu0 %719
        %723 = vset.pattern.permute.xlu0 0
        %724 = vperm.xlu0 %723, %v712
        %v725 = vpop.permute.xlu0 %724
        %728 = vset.pattern.permute.xlu0 0
        %729 = vperm.xlu0 %728, %v713
        %v730 = vpop.permute.xlu0 %729
        %733 = vset.pattern.permute.xlu0 0
        %734 = vperm.xlu0 %733, %v714
        %v735 = vpop.permute.xlu0 %734
        %738 = vset.pattern.permute.xlu0 0
        %739 = vperm.xlu0 %738, %v715
        %v740 = vpop.permute.xlu0 %739
        %743 = vset.pattern.permute.xlu0 0
        %744 = vperm.xlu0 %743, %v716
        %v745 = vpop.permute.xlu0 %744
        %vm747 = vcmask 261120
        %v749 = vsel %vm747, %v701, 0
        %v752 = vsel %vm747, %v702, 0
        %v755 = vsel %vm747, %v703, 0
        %v758 = vsel %vm747, %v704, 0
        %v761 = vsel %vm747, %v705, 0
        %v764 = vsel %vm747, %v706, 0
        %766 = vmatprep.subr.mxu0 0.0
        %767 = vmatpush1.msra.mxu0 %v707
        %768 = vmatprep.subr.mxu0 0.0
        %769 = vmatpush1.msra.mxu0 %v708
        %770 = vmatprep.subr.mxu0 0.0
        %771 = vmatpush1.msra.mxu0 %v709
        %772 = vmatprep.subr.mxu0 0.0
        %773 = vmatpush1.msra.mxu0 %v710
        %774 = vmatprep.subr.mxu0 0.0
        %775 = vmatpush1.msra.mxu0 0.0
        %776 = vmatprep.subr.mxu0 0.0
        %777 = vmatpush1.msra.mxu0 0.0
        %778 = vmatprep.subr.mxu0 0.0
        %779 = vmatpush1.msra.mxu0 0.0
        %780 = vmatprep.subr.mxu0 0.0
        %781 = vmatpush1.msra.mxu0 0.0
        %782 = vmatprep.subr.mxu0 0.0
        %783 = vmatpush1.msra.mxu0 0.0
        %784 = vmatprep.subr.mxu0 0.0
        %785 = vmatpush1.msra.mxu0 0.0
        %786 = vmatprep.subr.mxu0 0.0
        %787 = vmatpush1.msra.mxu0 0.0
        %788 = vmatprep.subr.mxu0 0.0
        %789 = vmatpush1.msra.mxu0 0.0
        %790 = vmatprep.subr.mxu0 0.0
        %791 = vmatpush1.msra.mxu0 0.0
        %792 = vmatprep.subr.mxu0 0.0
        %793 = vmatpush1.msra.mxu0 0.0
        %794 = vmatprep.subr.mxu0 0.0
        %795 = vmatpush1.msra.mxu0 0.0
        %796 = vmatprep.subr.mxu0 0.0
        %797 = vmatpush1.msra.mxu0 0.0
        %798 = vmatprep.subr.mxu0 0.0
        %799 = vmatpush1.msra.mxu0 0.0
        %800 = vmatprep.subr.mxu0 0.0
        %801 = vmatpush1.msra.mxu0 0.0
        %802 = vmatprep.subr.mxu0 0.0
        %803 = vmatpush1.msra.mxu0 0.0
        %804 = vmatprep.subr.mxu0 0.0
        %805 = vmatpush1.msra.mxu0 0.0
        %806 = vmatprep.subr.mxu0 0.0
        %807 = vmatpush1.msra.mxu0 0.0
        %808 = vmatprep.subr.mxu0 0.0
        %809 = vmatpush1.msra.mxu0 0.0
        %810 = vmatprep.subr.mxu0 0.0
        %811 = vmatpush1.msra.mxu0 0.0
        %812 = vmatprep.subr.mxu0 0.0
        %813 = vmatpush1.msra.mxu0 0.0
        %814 = vmatprep.subr.mxu0 0.0
        %815 = vmatpush1.msra.mxu0 0.0
        %816 = vmatprep.subr.mxu0 0.0
        %817 = vmatpush1.msra.mxu0 0.0
        %818 = vmatprep.subr.mxu0 0.0
        %819 = vmatpush1.msra.mxu0 0.0
        %820 = vmatprep.subr.mxu0 0.0
        %821 = vmatpush1.msra.mxu0 0.0
        %822 = vmatprep.subr.mxu0 0.0
        %823 = vmatpush1.msra.mxu0 0.0
        %824 = vmatprep.subr.mxu0 0.0
        %825 = vmatpush1.msra.mxu0 0.0
        %826 = vmatprep.subr.mxu0 0.0
        %827 = vmatpush1.msra.mxu0 0.0
        %828 = vmatprep.subr.mxu0 0.0
        %829 = vmatpush1.msra.mxu0 0.0
        %830 = vmatprep.mubr.f32.mxu0 0.0
        %831 = vmatmul.mubr.f32.gmra.mrb[0].mxu0 %v749
        %v832 = vpop.f32.mrb[0].mxu0
        %v833 = vadd.f32 %v720, %v832
        %v834 = vpop.f32.mrb[0].mxu0
        %835 = vmatprep.mubr.f32.mxu0 0.0
        %836 = vmatmul.mubr.f32.gmra.mrb[0].mxu0 %v752
        %v837 = vpop.f32.mrb[0].mxu0
        %v838 = vadd.f32 %v725, %v837
        %v839 = vpop.f32.mrb[0].mxu0
        %840 = vmatprep.mubr.f32.mxu0 0.0
        %841 = vmatmul.mubr.f32.gmra.mrb[0].mxu0 %v755
        %v842 = vpop.f32.mrb[0].mxu0
        %v843 = vadd.f32 %v730, %v842
        %v844 = vpop.f32.mrb[0].mxu0
        %845 = vmatprep.mubr.f32.mxu0 0.0
        %846 = vmatmul.mubr.f32.gmra.mrb[0].mxu0 %v758
        %v847 = vpop.f32.mrb[0].mxu0
        %v848 = vadd.f32 %v735, %v847
        %v849 = vpop.f32.mrb[0].mxu0
        %850 = vmatprep.mubr.f32.mxu0 0.0
        %851 = vmatmul.mubr.f32.gmra.mrb[0].mxu0 %v761
        %v852 = vpop.f32.mrb[0].mxu0
        %v853 = vadd.f32 %v740, %v852
        %v854 = vpop.f32.mrb[0].mxu0
        %855 = vmatprep.mubr.f32.mxu0 0.0
        %856 = vmatmul.mubr.f32.gmra.mrb[0].mxu0 %v764
        %v857 = vpop.f32.mrb[0].mxu0
        %v858 = vadd.f32 %v745, %v857
        %v859 = vpop.f32.mrb[0].mxu0
        %860 = vdwg.mxu0
        %v861 = vmul.f32 %v833, %v695
        %v862 = vmul.f32 %v838, %v696
        %v863 = vmul.f32 %v843, %v697
        %v864 = vmul.f32 %v848, %v698
        %v865 = vmul.f32 %v853, %v699
        %v866 = vmul.f32 %v858, %v700
        %v867 = vld [vmem:[#allocation2] sm:$0xff]
        %868 = vxpose.xlu0.b32.start [1/16] %v861, 128
        %869 = vxpose.xlu0.b32.cont [2/16] 0.0, 128
        %870 = vxpose.xlu0.b32.cont [3/16] 0.0, 128
        %871 = vxpose.xlu0.b32.cont [4/16] 0.0, 128
        %872 = vxpose.xlu0.b32.cont [5/16] 0.0, 128
        %873 = vxpose.xlu0.b32.cont [6/16] 0.0, 128
        %874 = vxpose.xlu0.b32.cont [7/16] 0.0, 128
        %875 = vxpose.xlu0.b32.cont [8/16] 0.0, 128
        %876 = vxpose.xlu0.b32.cont [9/16] 0.0, 128
        %877 = vxpose.xlu0.b32.cont [10/16] 0.0, 128
        %878 = vxpose.xlu0.b32.cont [11/16] 0.0, 128
        %879 = vxpose.xlu0.b32.cont [12/16] 0.0, 128
        %880 = vxpose.xlu0.b32.cont [13/16] 0.0, 128
        %881 = vxpose.xlu0.b32.cont [14/16] 0.0, 128
        %882 = vxpose.xlu0.b32.cont [15/16] 0.0, 128
        %883 = vxpose.xlu0.b32.end [16/16] 0.0, 128
        %v884 = vpop.trf.xlu0
        %v885 = vpop.trf.xlu0
        %v886 = vpop.trf.xlu0
        %v887 = vpop.trf.xlu0
        %v888 = vpop.trf.xlu0
        %v889 = vpop.trf.xlu0
        %v890 = vpop.trf.xlu0
        %v891 = vpop.trf.xlu0
        %v892 = vpop.trf.xlu0
        %v893 = vpop.trf.xlu0
        %v894 = vpop.trf.xlu0
        %v895 = vpop.trf.xlu0
        %v896 = vpop.trf.xlu0
        %v897 = vpop.trf.xlu0
        %v898 = vpop.trf.xlu0
        %v899 = vpop.trf.xlu0
        %vm900 = vcmask 64512
        %v902 = vsel %vm900, %v884, 0
        %v905 = vsel %vm900, %v885, 0
        %v908 = vsel %vm900, %v886, 0
        %v911 = vsel %vm900, %v887, 0
        %v914 = vsel %vm900, %v888, 0
        %v917 = vsel %vm900, %v889, 0
        %v920 = vsel %vm900, %v890, 0
        %v923 = vsel %vm900, %v891, 0
        %v926 = vsel %vm900, %v892, 0
        %v929 = vsel %vm900, %v893, 0
        %v932 = vsel %vm900, %v894, 0
        %v935 = vsel %vm900, %v895, 0
        %v938 = vsel %vm900, %v896, 0
        %v941 = vsel %vm900, %v897, 0
        %v944 = vsel %vm900, %v898, 0
        %v947 = vsel %vm900, %v899, 0
        %949 = vmatprep.subr.mxu0 0.0
        %950 = vmatpush1.msra.mxu0 %v867
        %951 = vmatprep.subr.mxu0 0.0
        %952 = vmatpush1.msra.mxu0 0.0
        %953 = vmatprep.subr.mxu0 0.0
        %954 = vmatpush1.msra.mxu0 0.0
        %955 = vmatprep.subr.mxu0 0.0
        %956 = vmatpush1.msra.mxu0 0.0
        %957 = vmatprep.subr.mxu0 0.0
        %958 = vmatpush1.msra.mxu0 0.0
        %959 = vmatprep.subr.mxu0 0.0
        %960 = vmatpush1.msra.mxu0 0.0
        %961 = vmatprep.subr.mxu0 0.0
        %962 = vmatpush1.msra.mxu0 0.0
        %963 = vmatprep.subr.mxu0 0.0
        %964 = vmatpush1.msra.mxu0 0.0
        %965 = vmatprep.subr.mxu0 0.0
        %966 = vmatpush1.msra.mxu0 0.0
        %967 = vmatprep.subr.mxu0 0.0
        %968 = vmatpush1.msra.mxu0 0.0
        %969 = vmatprep.subr.mxu0 0.0
        %970 = vmatpush1.msra.mxu0 0.0
        %971 = vmatprep.subr.mxu0 0.0
        %972 = vmatpush1.msra.mxu0 0.0
        %973 = vmatprep.subr.mxu0 0.0
        %974 = vmatpush1.msra.mxu0 0.0
        %975 = vmatprep.subr.mxu0 0.0
        %976 = vmatpush1.msra.mxu0 0.0
        %977 = vmatprep.subr.mxu0 0.0
        %978 = vmatpush1.msra.mxu0 0.0
        %979 = vmatprep.subr.mxu0 0.0
        %980 = vmatpush1.msra.mxu0 0.0
        %981 = vmatprep.subr.mxu0 0.0
        %982 = vmatpush1.msra.mxu0 0.0
        %983 = vmatprep.subr.mxu0 0.0
        %984 = vmatpush1.msra.mxu0 0.0
        %985 = vmatprep.subr.mxu0 0.0
        %986 = vmatpush1.msra.mxu0 0.0
        %987 = vmatprep.subr.mxu0 0.0
        %988 = vmatpush1.msra.mxu0 0.0
        %989 = vmatprep.subr.mxu0 0.0
        %990 = vmatpush1.msra.mxu0 0.0
        %991 = vmatprep.subr.mxu0 0.0
        %992 = vmatpush1.msra.mxu0 0.0
        %993 = vmatprep.subr.mxu0 0.0
        %994 = vmatpush1.msra.mxu0 0.0
        %995 = vmatprep.subr.mxu0 0.0
        %996 = vmatpush1.msra.mxu0 0.0
        %997 = vmatprep.subr.mxu0 0.0
        %998 = vmatpush1.msra.mxu0 0.0
        %999 = vmatprep.subr.mxu0 0.0
        %1000 = vmatpush1.msra.mxu0 0.0
        %1001 = vmatprep.subr.mxu0 0.0
        %1002 = vmatpush1.msra.mxu0 0.0
        %1003 = vmatprep.subr.mxu0 0.0
        %1004 = vmatpush1.msra.mxu0 0.0
        %1005 = vmatprep.subr.mxu0 0.0
        %1006 = vmatpush1.msra.mxu0 0.0
        %1007 = vmatprep.subr.mxu0 0.0
        %1008 = vmatpush1.msra.mxu0 0.0
        %1009 = vmatprep.subr.mxu0 0.0
        %1010 = vmatpush1.msra.mxu0 0.0
        %1011 = vmatprep.subr.mxu0 0.0
        %1012 = vmatpush1.msra.mxu0 0.0
        %1013 = vmatprep.mubr.f32.mxu0 0.0
        %1014 = vmatmul.mubr.f32.gmra.mrb[0].mxu0 %v902
        %v1015 = vpop.f32.mrb[0].mxu0
        %v1016 = vadd.f32 0.0, %v1015
        %v1017 = vpop.f32.mrb[0].mxu0
        %1018 = vmatprep.mubr.f32.mxu0 0.0
        %1019 = vmatmul.mubr.f32.gmra.mrb[0].mxu0 %v905
        %v1020 = vpop.f32.mrb[0].mxu0
        %v1021 = vadd.f32 0.0, %v1020
        %v1022 = vpop.f32.mrb[0].mxu0
        %1023 = vmatprep.mubr.f32.mxu0 0.0
        %1024 = vmatmul.mubr.f32.gmra.mrb[0].mxu0 %v908
        %v1025 = vpop.f32.mrb[0].mxu0
        %v1026 = vadd.f32 0.0, %v1025
        %v1027 = vpop.f32.mrb[0].mxu0
        %1028 = vmatprep.mubr.f32.mxu0 0.0
        %1029 = vmatmul.mubr.f32.gmra.mrb[0].mxu0 %v911
        %v1030 = vpop.f32.mrb[0].mxu0
        %v1031 = vadd.f32 0.0, %v1030
        %v1032 = vpop.f32.mrb[0].mxu0
        %1033 = vmatprep.mubr.f32.mxu0 0.0
        %1034 = vmatmul.mubr.f32.gmra.mrb[0].mxu0 %v914
        %v1035 = vpop.f32.mrb[0].mxu0
        %v1036 = vadd.f32 0.0, %v1035
        %v1037 = vpop.f32.mrb[0].mxu0
        %1038 = vmatprep.mubr.f32.mxu0 0.0
        %1039 = vmatmul.mubr.f32.gmra.mrb[0].mxu0 %v917
        %v1040 = vpop.f32.mrb[0].mxu0
        %v1041 = vadd.f32 0.0, %v1040
        %v1042 = vpop.f32.mrb[0].mxu0
        %1043 = vmatprep.mubr.f32.mxu0 0.0
        %1044 = vmatmul.mubr.f32.gmra.mrb[0].mxu0 %v920
        %v1045 = vpop.f32.mrb[0].mxu0
        %v1046 = vadd.f32 0.0, %v1045
        %v1047 = vpop.f32.mrb[0].mxu0
        %1048 = vmatprep.mubr.f32.mxu0 0.0
        %1049 = vmatmul.mubr.f32.gmra.mrb[0].mxu0 %v923
        %v1050 = vpop.f32.mrb[0].mxu0
        %v1051 = vadd.f32 0.0, %v1050
        %v1052 = vpop.f32.mrb[0].mxu0
        %1053 = vmatprep.mubr.f32.mxu0 0.0
        %1054 = vmatmul.mubr.f32.gmra.mrb[0].mxu0 %v926
        %v1055 = vpop.f32.mrb[0].mxu0
        %v1056 = vadd.f32 0.0, %v1055
        %v1057 = vpop.f32.mrb[0].mxu0
        %1058 = vmatprep.mubr.f32.mxu0 0.0
        %1059 = vmatmul.mubr.f32.gmra.mrb[0].mxu0 %v929
        %v1060 = vpop.f32.mrb[0].mxu0
        %v1061 = vadd.f32 0.0, %v1060
        %v1062 = vpop.f32.mrb[0].mxu0
        %1063 = vmatprep.mubr.f32.mxu0 0.0
        %1064 = vmatmul.mubr.f32.gmra.mrb[0].mxu0 %v932
        %v1065 = vpop.f32.mrb[0].mxu0
        %v1066 = vadd.f32 0.0, %v1065
        %v1067 = vpop.f32.mrb[0].mxu0
        %1068 = vmatprep.mubr.f32.mxu0 0.0
        %1069 = vmatmul.mubr.f32.gmra.mrb[0].mxu0 %v935
        %v1070 = vpop.f32.mrb[0].mxu0
        %v1071 = vadd.f32 0.0, %v1070
        %v1072 = vpop.f32.mrb[0].mxu0
        %1073 = vmatprep.mubr.f32.mxu0 0.0
        %1074 = vmatmul.mubr.f32.gmra.mrb[0].mxu0 %v938
        %v1075 = vpop.f32.mrb[0].mxu0
        %v1076 = vadd.f32 0.0, %v1075
        %v1077 = vpop.f32.mrb[0].mxu0
        %1078 = vmatprep.mubr.f32.mxu0 0.0
        %1079 = vmatmul.mubr.f32.gmra.mrb[0].mxu0 %v941
        %v1080 = vpop.f32.mrb[0].mxu0
        %v1081 = vadd.f32 0.0, %v1080
        %v1082 = vpop.f32.mrb[0].mxu0
        %1083 = vmatprep.mubr.f32.mxu0 0.0
        %1084 = vmatmul.mubr.f32.gmra.mrb[0].mxu0 %v944
        %v1085 = vpop.f32.mrb[0].mxu0
        %v1086 = vadd.f32 0.0, %v1085
        %v1087 = vpop.f32.mrb[0].mxu0
        %1088 = vmatprep.mubr.f32.mxu0 0.0
        %1089 = vmatmul.mubr.f32.gmra.mrb[0].mxu0 %v947
        %v1090 = vpop.f32.mrb[0].mxu0
        %v1091 = vadd.f32 0.0, %v1090
        %v1092 = vpop.f32.mrb[0].mxu0
        %1093 = vdwg.mxu0
        %v1094 = vld [vmem:[#allocation3] sm:$0x1]
        %v1095 = vmax.f32 %v1016, %v1036
        %v1096 = vmax.f32 %v1021, %v1041
        %v1097 = vmax.f32 %v1026, %v1046
        %v1098 = vmax.f32 %v1031, %v1051
        %v1099 = vmax.f32 %v1095, %v1056
        %v1100 = vmax.f32 %v1096, %v1061
        %v1101 = vmax.f32 %v1097, %v1066
        %v1102 = vmax.f32 %v1098, %v1071
        %v1103 = vmax.f32 %v1099, %v1076
        %v1104 = vmax.f32 %v1100, %v1081
        %v1105 = vmax.f32 %v1101, %v1086
        %v1106 = vmax.f32 %v1102, %v1091
        %v1107 = vmax.f32 %v1103, %v1104
        %v1108 = vmax.f32 %v1105, %v1106
        %v1109 = vmax.f32 %v1107, %v1108
        %v1110 = vrot.slane %v1109, 4
        %v1111 = vmax.f32 %v1109, %v1110
        %v1112 = vrot.slane %v1111, 2
        %v1113 = vmax.f32 %v1111, %v1112
        %v1114 = vrot.slane %v1113, 1
        %v1115 = vmax.f32 %v1113, %v1114
        %v1116 = vmax.f32 %v1094, %v1115
        %v1117 = vsub.f32 %v1094, %v1116
        %v1118 = vmul.f32 %v1117, 1.442695
        %v1119 = vpow.pop %v1118
        %v1121 = vlaneseq
        %v1122 = vshrl.u32 %v1121, 7
        %v1123 = vsub.s32 0, %v1122
        %v1124 = vrot.slane %v1116, %v1123
        %v1126 = vsub.f32 %v1016, %v1124
        %v1127 = vsub.f32 %v1021, %v1124
        %v1128 = vsub.f32 %v1026, %v1124
        %v1129 = vsub.f32 %v1031, %v1124
        %v1130 = vsub.f32 %v1036, %v1124
        %v1131 = vsub.f32 %v1041, %v1124
        %v1132 = vsub.f32 %v1046, %v1124
        %v1133 = vsub.f32 %v1051, %v1124
        %v1134 = vsub.f32 %v1056, %v1124
        %v1135 = vsub.f32 %v1061, %v1124
        %v1136 = vsub.f32 %v1066, %v1124
        %v1137 = vsub.f32 %v1071, %v1124
        %v1138 = vsub.f32 %v1076, %v1124
        %v1139 = vsub.f32 %v1081, %v1124
        %v1140 = vsub.f32 %v1086, %v1124
        %v1141 = vsub.f32 %v1091, %v1124
        %v1142 = vmul.f32 %v1126, 1.442695
        %v1143 = vpow.pop %v1142
        %v1144 = vmul.f32 %v1127, 1.442695
        %v1145 = vpow.pop %v1144
        %v1146 = vmul.f32 %v1128, 1.442695
        %v1147 = vpow.pop %v1146
        %v1148 = vmul.f32 %v1129, 1.442695
        %v1149 = vpow.pop %v1148
        %v1150 = vmul.f32 %v1130, 1.442695
        %v1151 = vpow.pop %v1150
        %v1152 = vmul.f32 %v1131, 1.442695
        %v1153 = vpow.pop %v1152
        %v1154 = vmul.f32 %v1132, 1.442695
        %v1155 = vpow.pop %v1154
        %v1156 = vmul.f32 %v1133, 1.442695
        %v1157 = vpow.pop %v1156
        %v1158 = vmul.f32 %v1134, 1.442695
        %v1159 = vpow.pop %v1158
        %v1160 = vmul.f32 %v1135, 1.442695
        %v1161 = vpow.pop %v1160
        %v1162 = vmul.f32 %v1136, 1.442695
        %v1163 = vpow.pop %v1162
        %v1164 = vmul.f32 %v1137, 1.442695
        %v1165 = vpow.pop %v1164
        %v1166 = vmul.f32 %v1138, 1.442695
        %v1167 = vpow.pop %v1166
        %v1168 = vmul.f32 %v1139, 1.442695
        %v1169 = vpow.pop %v1168
        %v1170 = vmul.f32 %v1140, 1.442695
        %v1171 = vpow.pop %v1170
        %v1172 = vmul.f32 %v1141, 1.442695
        %v1173 = vpow.pop %v1172
        %v1174 = vld [vmem:[#allocation4] sm:$0xff]
        %v1175 = vld [vmem:[#allocation4 + $0x8] sm:$0xff]
        %v1176 = vld [vmem:[#allocation4 + $0x10] sm:$0xff]
        %v1177 = vld [vmem:[#allocation4 + $0x18] sm:$0xff]
        %v1178 = vld [vmem:[#allocation4 + $0x20] sm:$0xff]
        %v1180 = vlaneseq
        %v1181 = vshrl.u32 %v1180, 7
        %v1182 = vsub.s32 0, %v1181
        %v1183 = vrot.slane %v1119, %v1182
        %v1185 = vmul.f32 %v1183, %v1174
        %v1186 = vmul.f32 %v1183, %v1175
        %v1187 = vmul.f32 %v1183, %v1176
        %v1188 = vmul.f32 %v1183, %v1177
        %v1189 = vmul.f32 %v1183, %v1178
        %1190 = vmatprep.subr.mxu0 0.0
        %1191 = vmatpush1.msra.mxu0 %v1143
        %1192 = vmatprep.subr.mxu0 0.0
        %1193 = vmatpush1.msra.mxu0 %v1145
        %1194 = vmatprep.subr.mxu0 0.0
        %1195 = vmatpush1.msra.mxu0 %v1147
        %1196 = vmatprep.subr.mxu0 0.0
        %1197 = vmatpush1.msra.mxu0 %v1149
        %1198 = vmatprep.subr.mxu0 0.0
        %1199 = vmatpush1.msra.mxu0 %v1151
        %1200 = vmatprep.subr.mxu0 0.0
        %1201 = vmatpush1.msra.mxu0 %v1153
        %1202 = vmatprep.subr.mxu0 0.0
        %1203 = vmatpush1.msra.mxu0 %v1155
        %1204 = vmatprep.subr.mxu0 0.0
        %1205 = vmatpush1.msra.mxu0 %v1157
        %1206 = vmatprep.subr.mxu0 0.0
        %1207 = vmatpush1.msra.mxu0 %v1159
        %1208 = vmatprep.subr.mxu0 0.0
        %1209 = vmatpush1.msra.mxu0 %v1161
        %1210 = vmatprep.subr.mxu0 0.0
        %1211 = vmatpush1.msra.mxu0 %v1163
        %1212 = vmatprep.subr.mxu0 0.0
        %1213 = vmatpush1.msra.mxu0 %v1165
        %1214 = vmatprep.subr.mxu0 0.0
        %1215 = vmatpush1.msra.mxu0 %v1167
        %1216 = vmatprep.subr.mxu0 0.0
        %1217 = vmatpush1.msra.mxu0 %v1169
        %1218 = vmatprep.subr.mxu0 0.0
        %1219 = vmatpush1.msra.mxu0 %v1171
        %1220 = vmatprep.subr.mxu0 0.0
        %1221 = vmatpush1.msra.mxu0 %v1173
        %1222 = vmatprep.subr.mxu0 0.0
        %1223 = vmatpush1.msra.mxu0 0.0
        %1224 = vmatprep.subr.mxu0 0.0
        %1225 = vmatpush1.msra.mxu0 0.0
        %1226 = vmatprep.subr.mxu0 0.0
        %1227 = vmatpush1.msra.mxu0 0.0
        %1228 = vmatprep.subr.mxu0 0.0
        %1229 = vmatpush1.msra.mxu0 0.0
        %1230 = vmatprep.subr.mxu0 0.0
        %1231 = vmatpush1.msra.mxu0 0.0
        %1232 = vmatprep.subr.mxu0 0.0
        %1233 = vmatpush1.msra.mxu0 0.0
        %1234 = vmatprep.subr.mxu0 0.0
        %1235 = vmatpush1.msra.mxu0 0.0
        %1236 = vmatprep.subr.mxu0 0.0
        %1237 = vmatpush1.msra.mxu0 0.0
        %1238 = vmatprep.subr.mxu0 0.0
        %1239 = vmatpush1.msra.mxu0 0.0
        %1240 = vmatprep.subr.mxu0 0.0
        %1241 = vmatpush1.msra.mxu0 0.0
        %1242 = vmatprep.subr.mxu0 0.0
        %1243 = vmatpush1.msra.mxu0 0.0
        %1244 = vmatprep.subr.mxu0 0.0
        %1245 = vmatpush1.msra.mxu0 0.0
        %1246 = vmatprep.subr.mxu0 0.0
        %1247 = vmatpush1.msra.mxu0 0.0
        %1248 = vmatprep.subr.mxu0 0.0
        %1249 = vmatpush1.msra.mxu0 0.0
        %1250 = vmatprep.subr.mxu0 0.0
        %1251 = vmatpush1.msra.mxu0 0.0
        %1252 = vmatprep.subr.mxu0 0.0
        %1253 = vmatpush1.msra.mxu0 0.0
        %1254 = vmatprep.mubr.f32.mxu0 0.0
        %1255 = vmatmul.mubr.f32.gmra.mrb[0].mxu0 %v862
        %v1256 = vpop.f32.mrb[0].mxu0
        %v1257 = vadd.f32 0.0, %v1256
        %v1258 = vpop.f32.mrb[0].mxu0
        %1259 = vmatprep.mubr.f32.mxu0 0.0
        %1260 = vmatmul.mubr.f32.gmra.mrb[0].mxu0 %v863
        %v1261 = vpop.f32.mrb[0].mxu0
        %v1262 = vadd.f32 0.0, %v1261
        %v1263 = vpop.f32.mrb[0].mxu0
        %1264 = vmatprep.mubr.f32.mxu0 0.0
        %1265 = vmatmul.mubr.f32.gmra.mrb[0].mxu0 %v864
        %v1266 = vpop.f32.mrb[0].mxu0
        %v1267 = vadd.f32 0.0, %v1266
        %v1268 = vpop.f32.mrb[0].mxu0
        %1269 = vmatprep.mubr.f32.mxu0 0.0
        %1270 = vmatmul.mubr.f32.gmra.mrb[0].mxu0 %v865
        %v1271 = vpop.f32.mrb[0].mxu0
        %v1272 = vadd.f32 0.0, %v1271
        %v1273 = vpop.f32.mrb[0].mxu0
        %1274 = vmatprep.mubr.f32.mxu0 0.0
        %1275 = vmatmul.mubr.f32.gmra.mrb[0].mxu0 %v866
        %v1276 = vpop.f32.mrb[0].mxu0
        %v1277 = vadd.f32 0.0, %v1276
        %v1278 = vpop.f32.mrb[0].mxu0
        %1279 = vdwg.mxu0
        %v1280 = vadd.f32 %v1185, %v1257
        %v1281 = vadd.f32 %v1186, %v1262
        %v1282 = vadd.f32 %v1187, %v1267
        %v1283 = vadd.f32 %v1188, %v1272
        %v1284 = vadd.f32 %v1189, %v1277
        %1285 = vst [vmem:[#allocation4] sm:$0xff] %v1280
        %1286 = vst [vmem:[#allocation4 + $0x8] sm:$0xff] %v1281
        %1287 = vst [vmem:[#allocation4 + $0x10] sm:$0xff] %v1282
        %1288 = vst [vmem:[#allocation4 + $0x18] sm:$0xff] %v1283
        %1289 = vst [vmem:[#allocation4 + $0x20] sm:$0xff] %v1284
        %1290 = vst [vmem:[#allocation3] sm:$0x1] %v1116
        %p1291 = scmp.eq.s32.totalorder %s35, 1
        // Predicated region
        $region107: #{tpu_custom_call.1} parent=93 // pred_check
          %p1292 = pneg %p1291
        $region108: #{tpu_custom_call.1} parent=93 // pred_check_branch
          %1294 = sbr.rel (%p1292) target = $region110
        $region109: #{tpu_custom_call.1} parent=93 // pred_region
          %v1295 = vld [vmem:[#allocation4] sm:$0xff]
          %v1296 = vld [vmem:[#allocation4 + $0x8] sm:$0xff]
          %v1297 = vld [vmem:[#allocation4 + $0x10] sm:$0xff]
          %v1298 = vld [vmem:[#allocation4 + $0x18] sm:$0xff]
          %v1299 = vld [vmem:[#allocation4 + $0x20] sm:$0xff]
          %v1300 = vrcp.pop %v1299
          %s1301 = sld [smem:[#allocation5]]
          %v1302 = vlaneseq
          %v1303 = vshrl.u32 %v1302, 7
          %v1304 = vsub.s32 0, %v1303
          %v1305 = vrot.slane %v1300, %v1304
          %v1306 = vmul.f32 %v1295, %v1305
          %v1307 = vmul.f32 %v1296, %v1305
          %v1308 = vmul.f32 %v1297, %v1305
          %v1309 = vmul.f32 %v1298, %v1305
          %v1310 = vstv %s1301
          %v1311 = vmul.f32 %v1310, %v1306
          %v1312 = vmul.f32 %v1310, %v1307
          %v1313 = vmul.f32 %v1310, %v1308
          %v1314 = vmul.f32 %v1310, %v1309
          %v1315 = vld [vmem:[%s452] sm:$0xff]
          %v1316 = vld [vmem:[%s452 + $0x8] sm:$0xff]
          %v1317 = vld [vmem:[%s452 + $0x10] sm:$0xff]
          %v1318 = vld [vmem:[%s452 + $0x18] sm:$0xff]
          %v1319 = vadd.f32 %v1311, %v1315
          %v1320 = vadd.f32 %v1312, %v1316
          %v1321 = vadd.f32 %v1313, %v1317
          %v1322 = vadd.f32 %v1314, %v1318
          %1323 = vst [vmem:[%s514] sm:$0xff] %v1319
          %1324 = vst [vmem:[%s514 + $0x8] sm:$0xff] %v1320
          %1325 = vst [vmem:[%s514 + $0x10] sm:$0xff] %v1321
          %1326 = vst [vmem:[%s514 + $0x18] sm:$0xff] %v1322
        $region110: #{tpu_custom_call.1} parent=93 // pred_fallthru
          _
        %s1327 = sand.u32 %s295, 1
        %s1328 = scalar_lea.sflag [#allocation9], %s1327
        %s1329 = sand.u32 %s295, 1
        %s1330 = smul.addr %s1329, 32
        %s1331 = scalar_lea.vmem [#allocation10], %s1330
        // Predicated region
        $region111: #{tpu_custom_call.1} parent=93 // pred_check
          %p1332 = pneg %p305
        $region112: #{tpu_custom_call.1} parent=93 // pred_check_branch
          %1334 = sbr.rel (%p1332) target = $region114
        $region113: #{tpu_custom_call.1} parent=93 // pred_region
          %s1336 = ssub.s32 512, 512
          %1337 = vsyncadd %s1328, %s1336
          %s1338 = smul.addr %s33, 8
          %s1339 = sadd.s32 %s34, %s1338
          %s1340 = smul.addr %s1339, 128
          %s1341 = scalar_lea.hbm %s10, %s1340
          %s1342 = sshll.u32 %s1331, 4
          %s1343 = int_to_ptr.vmem [resolvable:$true] %s1342
          %1348 = dma.vmem_to_hbm [thread:$0]  %s1343, 512, %s1341, %s1328, 128, 256, 8
        $region114: #{tpu_custom_call.1} parent=93 // pred_fallthru
          _
      $region94: #{tpu_custom_call.1} parent=5 // pred_fallthru
        _
      %p1349 = scmp.le.s32.totalorder 2, %s23
      // Predicated region
      $region115: #{tpu_custom_call.1} parent=5 // pred_check
        %p1350 = pneg %p1349
      $region116: #{tpu_custom_call.1} parent=5 // pred_check_branch
        %1352 = sbr.rel (%p1350) target = $region118
      $region117: #{tpu_custom_call.1} parent=5 // pred_region
        %s1353 = ssub.s32 %s23, 2
        // Predicated region
        $region119: #{tpu_custom_call.1} parent=117 // pred_check
          %p1354 = pneg %p311
        $region120: #{tpu_custom_call.1} parent=117 // pred_check_branch
          %1356 = sbr.rel (%p1354) target = $region122
        $region121: #{tpu_custom_call.1} parent=117 // pred_region
          %s1357 = sand.u32 %s296, 1
          %s1358 = scalar_lea.sflag [#allocation9], %s1357
          %s1359 = sand.u32 %s296, 1
          %s1360 = smul.addr %s1359, 32
          %s1361 = scalar_lea.vmem [#allocation10], %s1360
          %1362 = dma.done %s1358, 512
        $region122: #{tpu_custom_call.1} parent=117 // pred_fallthru
          _
      $region118: #{tpu_custom_call.1} parent=5 // pred_fallthru
        _
    $region6: #{tpu_custom_call.1} parent=1 // loop_footer
      %s27 = sadd.s32 1, %s23
    $region7: #{tpu_custom_call.1} parent=1 // loop_footer_branch
      %22 = sbr.rel target = $region3
    $region8: #{tpu_custom_call.1} parent=1 // loop_exit
      _
    %1363 = vsyncpa [#allocation8], 1
    %s1364 = scalar_lea.sflag [#allocation8], 1
    %1365 = vsyncpa %s1364, 1
    %1366 = vsyncpa [#allocation9], 1
    %s1367 = scalar_lea.sflag [#allocation9], 1
    %1368 = vsyncpa %s1367, 1

</llo_original>
